<compile_context>
chip_gen: v7x
topology: tpu7x:2x2x1
jax: 0.10.0
libtpu: 0.0.40
codegen_flags: <defaults>
</compile_context>

<pallas_src>
import functools

import jax
import jax.numpy as jnp
import numpy as np
from jax.experimental import pallas as pl
from jax.experimental.pallas import tpu as pltpu

H1, H2, H3 = 1000, 100, 20  # hidden sizes from Net.__init__
LANE = 128                  # TPU lane width


def _round_up(n, m):
    return ((n + m - 1) // m) * m


def _mlp_kernel(x_ref, w1_ref, b1_ref, w2_ref, b2_ref,
                w3_ref, b3_ref, w4_ref, b4_ref, o_ref):
    """Fused 4-layer MLP for one 128-row batch tile. All operands in VMEM.

    x / weights are bf16 (MXU-native); accumulation, bias-add and ReLU in f32.
    """
    x = x_ref[...]                                                     # bf16
    h = jnp.dot(x, w1_ref[...], preferred_element_type=jnp.float32) + b1_ref[...]
    h = jnp.maximum(h, 0.0).astype(jnp.bfloat16)   # relu1 (fc1_drop = identity)
    h = jnp.dot(h, w2_ref[...], preferred_element_type=jnp.float32) + b2_ref[...]
    h = jnp.maximum(h, 0.0).astype(jnp.bfloat16)   # relu2 (fc2_drop = identity)
    h = jnp.dot(h, w3_ref[...], preferred_element_type=jnp.float32) + b3_ref[...]
    h = jnp.maximum(h, 0.0).astype(jnp.bfloat16)   # relu3 (fc3_drop = identity)
    o_ref[...] = (jnp.dot(h, w4_ref[...], preferred_element_type=jnp.float32)
                  + b4_ref[...]).astype(o_ref.dtype)


@functools.partial(jax.jit, static_argnames=("batch_tile",))
def net_forward(x, params, *, batch_tile=128):
    """Runs the fused MLP kernel, tiling over the (zero-padded) batch dim."""
    w1, b1, w2, b2, w3, b3, w4, b4 = params
    B, D_in = x.shape
    D_out = w4.shape[1]

    # Lane-aligned (padded) dimensions.
    D_in_p = _round_up(D_in, LANE)
    H1_p = _round_up(w1.shape[1], LANE)
    H2_p = _round_up(w2.shape[1], LANE)
    H3_p = _round_up(w3.shape[1], LANE)
    D_out_p = _round_up(D_out, LANE)
    B_p = _round_up(B, batch_tile)

    def pad2(a, rows, cols):
        return jnp.pad(a, ((0, rows - a.shape[0]), (0, cols - a.shape[1])))

    # bf16 only on MXU operands; biases stay f32 (VPU math in f32).
    xb = pad2(x, B_p, D_in_p).astype(jnp.bfloat16)
    w1p = pad2(w1, D_in_p, H1_p).astype(jnp.bfloat16)
    w2p = pad2(w2, H1_p, H2_p).astype(jnp.bfloat16)
    w3p = pad2(w3, H2_p, H3_p).astype(jnp.bfloat16)
    w4p = pad2(w4, H3_p, D_out_p).astype(jnp.bfloat16)
    b1p = pad2(b1, 1, H1_p)
    b2p = pad2(b2, 1, H2_p)
    b3p = pad2(b3, 1, H3_p)
    b4p = pad2(b4, 1, D_out_p)

    grid = (B_p // batch_tile,)

    # Grid-invariant weight/bias blocks: DMA'd once, VMEM-resident for the
    # whole grid.
    full = lambda shape: pl.BlockSpec(shape, lambda i: (0, 0))

    flops = 2 * B_p * (D_in_p * H1_p + H1_p * H2_p + H2_p * H3_p + H3_p * D_out_p)
    bytes_accessed = (
        xb.size * 2
        + (w1p.size + w2p.size + w3p.size + w4p.size) * 2
        + (b1p.size + b2p.size + b3p.size + b4p.size) * 4
        + B_p * D_out_p * 4)

    out_p = pl.pallas_call(
        _mlp_kernel,
        out_shape=jax.ShapeDtypeStruct((B_p, D_out_p), jnp.float32),
        grid_spec=pltpu.PrefetchScalarGridSpec(
            num_scalar_prefetch=0,
            grid=grid,
            in_specs=[
                pl.BlockSpec((batch_tile, D_in_p), lambda i: (i, 0)),  # x tile
                full(w1p.shape), full(b1p.shape),
                full(w2p.shape), full(b2p.shape),
                full(w3p.shape), full(b3p.shape),
                full(w4p.shape), full(b4p.shape),
            ],
            out_specs=pl.BlockSpec((batch_tile, D_out_p), lambda i: (i, 0)),
        ),
        compiler_params=pltpu.CompilerParams(
            dimension_semantics=("parallel",)),
        cost_estimate=pl.CostEstimate(flops=flops, transcendentals=0,
                                      bytes_accessed=bytes_accessed),
    )(xb, w1p, b1p, w2p, b2p, w3p, b3p, w4p, b4p)

    # Slice away batch padding and the padded output lanes.
    return out_p[:B, :D_out]


def init_params(key, input_dim, output_dim):
    """Deterministic init mirroring nn.Linear's U(-1/sqrt(fan_in), +1/sqrt(fan_in)).

    Weights are stored as (in_features, out_features) — the transpose of
    PyTorch's layout — so the kernel computes x @ W + b directly on the MXU.
    """
    dims = [(input_dim, H1), (H1, H2), (H2, H3), (H3, output_dim)]
    params = []
    keys = jax.random.split(key, 2 * len(dims))
    for li, (fan_in, fan_out) in enumerate(dims):
        bound = 1.0 / np.sqrt(fan_in)
        w = jax.random.uniform(keys[2 * li], (fan_in, fan_out),
                               minval=-bound, maxval=bound, dtype=jnp.float32)
        b = jax.random.uniform(keys[2 * li + 1], (1, fan_out),
                               minval=-bound, maxval=bound, dtype=jnp.float32)
        params += [w, b]
    return tuple(params)


def net_forward_ref(x, params):
    """Pure-JAX f32 reference of the eval-mode forward pass."""
    w1, b1, w2, b2, w3, b3, w4, b4 = params
    h = jnp.maximum(x @ w1 + b1, 0.0)
    h = jnp.maximum(h @ w2 + b2, 0.0)
    h = jnp.maximum(h @ w3 + b3, 0.0)
    return h @ w4 + b4


if __name__ == "__main__":
    input_dim, output_dim = 32, 10

    key = jax.random.PRNGKey(0)
    k_params, k_x = jax.random.split(key, 2)
    params = init_params(k_params, input_dim, output_dim)

    # Small demo batch (internally padded to a single 128-row MXU tile).
    x = jax.random.normal(k_x, (8, input_dim), dtype=jnp.float32)
    out = jax.block_until_ready(net_forward(x, params))
    ref = net_forward_ref(x, params)

    assert out.shape == (8, output_dim)
    # bf16 MXU operands with f32 accumulation -> loosened tolerance vs f32 ref.
    np.testing.assert_allclose(np.asarray(out), np.asarray(ref),
                               rtol=5e-2, atol=5e-2)

    print("KERNEL_OK")
</pallas_src>

<mosaic_0001>
module attributes {stable_mosaic.version = 11 : i64} {
  func.func @_mlp_kernel(%arg0: i32, %arg1: memref<128x128xbf16, #tpu.memory_space<vmem>>, %arg2: memref<128x1024xbf16, #tpu.memory_space<vmem>>, %arg3: memref<1x1024xf32, #tpu.memory_space<vmem>>, %arg4: memref<1024x128xbf16, #tpu.memory_space<vmem>>, %arg5: memref<1x128xf32, #tpu.memory_space<vmem>>, %arg6: memref<128x128xbf16, #tpu.memory_space<vmem>>, %arg7: memref<1x128xf32, #tpu.memory_space<vmem>>, %arg8: memref<128x128xbf16, #tpu.memory_space<vmem>>, %arg9: memref<1x128xf32, #tpu.memory_space<vmem>>, %arg10: memref<128x128xf32, #tpu.memory_space<vmem>>) attributes {dimension_semantics = [#tpu.dimension_semantics<parallel>], iteration_bounds = array<i64: 1>, scalar_prefetch = 0 : i64, scratch_operands = 0 : i64, tpu.core_type = #tpu.core_type<tc>, window_params = [{transform_indices = @transform_0, window_bounds = array<i64: 128, 128>}, {pipeline_mode = #tpu.pipeline_mode<synchronous>, transform_indices = @transform_1, window_bounds = array<i64: 128, 1024>}, {pipeline_mode = #tpu.pipeline_mode<synchronous>, transform_indices = @transform_2, window_bounds = array<i64: 1, 1024>}, {pipeline_mode = #tpu.pipeline_mode<synchronous>, transform_indices = @transform_3, window_bounds = array<i64: 1024, 128>}, {pipeline_mode = #tpu.pipeline_mode<synchronous>, transform_indices = @transform_4, window_bounds = array<i64: 1, 128>}, {pipeline_mode = #tpu.pipeline_mode<synchronous>, transform_indices = @transform_5, window_bounds = array<i64: 128, 128>}, {pipeline_mode = #tpu.pipeline_mode<synchronous>, transform_indices = @transform_6, window_bounds = array<i64: 1, 128>}, {pipeline_mode = #tpu.pipeline_mode<synchronous>, transform_indices = @transform_7, window_bounds = array<i64: 128, 128>}, {pipeline_mode = #tpu.pipeline_mode<synchronous>, transform_indices = @transform_8, window_bounds = array<i64: 1, 128>}, {transform_indices = @transform_9, window_bounds = array<i64: 128, 128>}]} {
    %c0 = arith.constant 0 : index
    %c0_0 = arith.constant 0 : index
    %0 = vector.load %arg1[%c0, %c0_0] : memref<128x128xbf16, #tpu.memory_space<vmem>>, vector<128x128xbf16>
    %c0_1 = arith.constant 0 : index
    %c0_2 = arith.constant 0 : index
    %1 = vector.load %arg2[%c0_1, %c0_2] : memref<128x1024xbf16, #tpu.memory_space<vmem>>, vector<128x1024xbf16>
    %cst = arith.constant dense<0.000000e+00> : vector<128x1024xf32>
    %2 = tpu.matmul %0, %1, %cst {dimension_numbers = #tpu.dot_dimension_numbers<[1], [0], [0], [1], [0, 0, 1, 1], [], []>} : vector<128x128xbf16>, vector<128x1024xbf16>, vector<128x1024xf32> -> vector<128x1024xf32>
    %c0_3 = arith.constant 0 : index
    %c0_4 = arith.constant 0 : index
    %3 = vector.load %arg3[%c0_3, %c0_4] : memref<1x1024xf32, #tpu.memory_space<vmem>>, vector<1x1024xf32>
    %4 = vector.broadcast %3 : vector<1x1024xf32> to vector<128x1024xf32>
    %5 = arith.addf %2, %4 : vector<128x1024xf32>
    %cst_5 = arith.constant 0.000000e+00 : f32
    %6 = vector.broadcast %cst_5 : f32 to vector<128x1024xf32>
    %7 = arith.maximumf %5, %6 : vector<128x1024xf32>
    %8 = arith.truncf %7 : vector<128x1024xf32> to vector<128x1024xbf16>
    %c0_6 = arith.constant 0 : index
    %c0_7 = arith.constant 0 : index
    %9 = vector.load %arg4[%c0_6, %c0_7] : memref<1024x128xbf16, #tpu.memory_space<vmem>>, vector<1024x128xbf16>
    %cst_8 = arith.constant dense<0.000000e+00> : vector<128x128xf32>
    %10 = tpu.matmul %8, %9, %cst_8 {dimension_numbers = #tpu.dot_dimension_numbers<[1], [0], [0], [1], [0, 0, 1, 1], [], []>} : vector<128x1024xbf16>, vector<1024x128xbf16>, vector<128x128xf32> -> vector<128x128xf32>
    %c0_9 = arith.constant 0 : index
    %c0_10 = arith.constant 0 : index
    %11 = vector.load %arg5[%c0_9, %c0_10] : memref<1x128xf32, #tpu.memory_space<vmem>>, vector<1x128xf32>
    %12 = vector.broadcast %11 : vector<1x128xf32> to vector<128x128xf32>
    %13 = arith.addf %10, %12 : vector<128x128xf32>
    %cst_11 = arith.constant 0.000000e+00 : f32
    %14 = vector.broadcast %cst_11 : f32 to vector<128x128xf32>
    %15 = arith.maximumf %13, %14 : vector<128x128xf32>
    %16 = arith.truncf %15 : vector<128x128xf32> to vector<128x128xbf16>
    %c0_12 = arith.constant 0 : index
    %c0_13 = arith.constant 0 : index
    %17 = vector.load %arg6[%c0_12, %c0_13] : memref<128x128xbf16, #tpu.memory_space<vmem>>, vector<128x128xbf16>
    %cst_14 = arith.constant dense<0.000000e+00> : vector<128x128xf32>
    %18 = tpu.matmul %16, %17, %cst_14 {dimension_numbers = #tpu.dot_dimension_numbers<[1], [0], [0], [1], [0, 0, 1, 1], [], []>} : vector<128x128xbf16>, vector<128x128xbf16>, vector<128x128xf32> -> vector<128x128xf32>
    %c0_15 = arith.constant 0 : index
    %c0_16 = arith.constant 0 : index
    %19 = vector.load %arg7[%c0_15, %c0_16] : memref<1x128xf32, #tpu.memory_space<vmem>>, vector<1x128xf32>
    %20 = vector.broadcast %19 : vector<1x128xf32> to vector<128x128xf32>
    %21 = arith.addf %18, %20 : vector<128x128xf32>
    %cst_17 = arith.constant 0.000000e+00 : f32
    %22 = vector.broadcast %cst_17 : f32 to vector<128x128xf32>
    %23 = arith.maximumf %21, %22 : vector<128x128xf32>
    %24 = arith.truncf %23 : vector<128x128xf32> to vector<128x128xbf16>
    %c0_18 = arith.constant 0 : index
    %c0_19 = arith.constant 0 : index
    %25 = vector.load %arg8[%c0_18, %c0_19] : memref<128x128xbf16, #tpu.memory_space<vmem>>, vector<128x128xbf16>
    %cst_20 = arith.constant dense<0.000000e+00> : vector<128x128xf32>
    %26 = tpu.matmul %24, %25, %cst_20 {dimension_numbers = #tpu.dot_dimension_numbers<[1], [0], [0], [1], [0, 0, 1, 1], [], []>} : vector<128x128xbf16>, vector<128x128xbf16>, vector<128x128xf32> -> vector<128x128xf32>
    %c0_21 = arith.constant 0 : index
    %c0_22 = arith.constant 0 : index
    %27 = vector.load %arg9[%c0_21, %c0_22] : memref<1x128xf32, #tpu.memory_space<vmem>>, vector<1x128xf32>
    %28 = vector.broadcast %27 : vector<1x128xf32> to vector<128x128xf32>
    %29 = arith.addf %26, %28 : vector<128x128xf32>
    %c0_23 = arith.constant 0 : index
    %c0_24 = arith.constant 0 : index
    %30 = vector.load %arg10[%c0_23, %c0_24] : memref<128x128xf32, #tpu.memory_space<vmem>>, vector<128x128xf32>
    tpu.vector_store %arg10[%c0_23, %c0_24], %29 {strides = array<i32>} : memref<128x128xf32, #tpu.memory_space<vmem>>, vector<128x128xf32>,
    return
  }
  func.func @transform_0(%arg0: i32) -> (i32, i32) {
    %c0_i32 = arith.constant 0 : i32
    %c0_i32_0 = arith.constant 0 : i32
    return %arg0, %c0_i32 : i32, i32
  }
  func.func @transform_1(%arg0: i32) -> (i32, i32) {
    %c0_i32 = arith.constant 0 : i32
    %c0_i32_0 = arith.constant 0 : i32
    %c0_i32_1 = arith.constant 0 : i32
    return %c0_i32, %c0_i32_0 : i32, i32
  }
  func.func @transform_2(%arg0: i32) -> (i32, i32) {
    %c0_i32 = arith.constant 0 : i32
    %c0_i32_0 = arith.constant 0 : i32
    %c0_i32_1 = arith.constant 0 : i32
    return %c0_i32, %c0_i32_0 : i32, i32
  }
  func.func @transform_3(%arg0: i32) -> (i32, i32) {
    %c0_i32 = arith.constant 0 : i32
    %c0_i32_0 = arith.constant 0 : i32
    %c0_i32_1 = arith.constant 0 : i32
    return %c0_i32, %c0_i32_0 : i32, i32
  }
  func.func @transform_4(%arg0: i32) -> (i32, i32) {
    %c0_i32 = arith.constant 0 : i32
    %c0_i32_0 = arith.constant 0 : i32
    %c0_i32_1 = arith.constant 0 : i32
    return %c0_i32, %c0_i32_0 : i32, i32
  }
  func.func @transform_5(%arg0: i32) -> (i32, i32) {
    %c0_i32 = arith.constant 0 : i32
    %c0_i32_0 = arith.constant 0 : i32
    %c0_i32_1 = arith.constant 0 : i32
    return %c0_i32, %c0_i32_0 : i32, i32
  }
  func.func @transform_6(%arg0: i32) -> (i32, i32) {
    %c0_i32 = arith.constant 0 : i32
    %c0_i32_0 = arith.constant 0 : i32
    %c0_i32_1 = arith.constant 0 : i32
    return %c0_i32, %c0_i32_0 : i32, i32
  }
  func.func @transform_7(%arg0: i32) -> (i32, i32) {
    %c0_i32 = arith.constant 0 : i32
    %c0_i32_0 = arith.constant 0 : i32
    %c0_i32_1 = arith.constant 0 : i32
    return %c0_i32, %c0_i32_0 : i32, i32
  }
  func.func @transform_8(%arg0: i32) -> (i32, i32) {
    %c0_i32 = arith.constant 0 : i32
    %c0_i32_0 = arith.constant 0 : i32
    %c0_i32_1 = arith.constant 0 : i32
    return %c0_i32, %c0_i32_0 : i32, i32
  }
  func.func @transform_9(%arg0: i32) -> (i32, i32) {
    %c0_i32 = arith.constant 0 : i32
    %c0_i32_0 = arith.constant 0 : i32
    return %arg0, %c0_i32 : i32, i32
  }
}

</mosaic_0001>

<llo_original>
// kernel: net_forward.1
$region0: #{net_forward.1}
  #allocation0 [shape = 'u32[]', space=smem, size = 0x4, offset = 0x4, fixed_abs, tag = 'smem constant byte address 0x4 - core index']
  #allocation1 [shape = 'u32[144,128]{1,0:T(1,128)}', space=vmem, size = 0x12000, scoped, tag = 'internal scratch']
  %s0 = inlined_call_operand.vmem [shape: bf16[128,128], index: 0, kind: input, shape index: {}]
  %s1 = inlined_call_operand.vmem [shape: bf16[128,1024], index: 1, kind: input, shape index: {}]
  %s2 = inlined_call_operand.vmem [shape: f32[1,1024], index: 2, kind: input, shape index: {}]
  %s3 = inlined_call_operand.vmem [shape: bf16[1024,128], index: 3, kind: input, shape index: {}]
  %s4 = inlined_call_operand.vmem [shape: f32[1,128], index: 4, kind: input, shape index: {}]
  %s5 = inlined_call_operand.vmem [shape: bf16[128,128], index: 5, kind: input, shape index: {}]
  %s6 = inlined_call_operand.vmem [shape: f32[1,128], index: 6, kind: input, shape index: {}]
  %s7 = inlined_call_operand.vmem [shape: bf16[128,128], index: 7, kind: input, shape index: {}]
  %s8 = inlined_call_operand.vmem [shape: f32[1,128], index: 8, kind: input, shape index: {}]
  %s9 = inlined_call_operand.vmem [shape: f32[128,128], index: 9, kind: output, shape index: {}]
  %s10 = sld [smem:[#allocation0]]
  $region46: #{net_forward.1} parent=0
    _
  %s12 = ssub.s32 1, %s10
  %s13 = scalar_select 0, %s12, %s10
  // Predicated region
  $region2: #{net_forward.1} parent=0 // pred_check
    _
  $region3: #{net_forward.1} parent=0 // pred_check_branch
    %15 = sbr.rel (0) target = $region5
  $region4: #{net_forward.1} parent=0 // pred_region
    _
  $region5: #{net_forward.1} parent=0 // pred_fallthru
    _
  // Predicated region
  $region6: #{net_forward.1} parent=0 // pred_check
    _
  $region7: #{net_forward.1} parent=0 // pred_check_branch
    %17 = sbr.rel (0) target = $region9
  $region8: #{net_forward.1} parent=0 // pred_region
    _
  $region9: #{net_forward.1} parent=0 // pred_fallthru
    _
  // Predicated region
  $region10: #{net_forward.1} parent=0 // pred_check
    _
  $region11: #{net_forward.1} parent=0 // pred_check_branch
    %19 = sbr.rel (0) target = $region13
  $region12: #{net_forward.1} parent=0 // pred_region
    _
  $region13: #{net_forward.1} parent=0 // pred_fallthru
    _
  // Predicated region
  $region14: #{net_forward.1} parent=0 // pred_check
    _
  $region15: #{net_forward.1} parent=0 // pred_check_branch
    %21 = sbr.rel (0) target = $region17
  $region16: #{net_forward.1} parent=0 // pred_region
    _
  $region17: #{net_forward.1} parent=0 // pred_fallthru
    _
  // Predicated region
  $region18: #{net_forward.1} parent=0 // pred_check
    _
  $region19: #{net_forward.1} parent=0 // pred_check_branch
    %23 = sbr.rel (0) target = $region21
  $region20: #{net_forward.1} parent=0 // pred_region
    _
  $region21: #{net_forward.1} parent=0 // pred_fallthru
    _
  // Predicated region
  $region22: #{net_forward.1} parent=0 // pred_check
    _
  $region23: #{net_forward.1} parent=0 // pred_check_branch
    %25 = sbr.rel (0) target = $region25
  $region24: #{net_forward.1} parent=0 // pred_region
    _
  $region25: #{net_forward.1} parent=0 // pred_fallthru
    _
  // Predicated region
  $region26: #{net_forward.1} parent=0 // pred_check
    _
  $region27: #{net_forward.1} parent=0 // pred_check_branch
    %27 = sbr.rel (0) target = $region29
  $region28: #{net_forward.1} parent=0 // pred_region
    _
  $region29: #{net_forward.1} parent=0 // pred_fallthru
    _
  // Predicated region
  $region30: #{net_forward.1} parent=0 // pred_check
    _
  $region31: #{net_forward.1} parent=0 // pred_check_branch
    %29 = sbr.rel (0) target = $region33
  $region32: #{net_forward.1} parent=0 // pred_region
    _
  $region33: #{net_forward.1} parent=0 // pred_fallthru
    _
  // Predicated region
  $region34: #{net_forward.1} parent=0 // pred_check
    _
  $region35: #{net_forward.1} parent=0 // pred_check_branch
    %31 = sbr.rel (0) target = $region37
  $region36: #{net_forward.1} parent=0 // pred_region
    _
  $region37: #{net_forward.1} parent=0 // pred_fallthru
    _
  %v33 = vld [vmem:[%s0] sm:$0xf]
  %v34 = vld [vmem:[%s0 + $0x4] sm:$0xf]
  %v35 = vld [vmem:[%s0 + $0x8] sm:$0xf]
  %v36 = vld [vmem:[%s0 + $0xc] sm:$0xf]
  %v37 = vld [vmem:[%s0 + $0x10] sm:$0xf]
  %v38 = vld [vmem:[%s0 + $0x14] sm:$0xf]
  %v39 = vld [vmem:[%s0 + $0x18] sm:$0xf]
  %v40 = vld [vmem:[%s0 + $0x1c] sm:$0xf]
  %v41 = vld [vmem:[%s0 + $0x20] sm:$0xf]
  %v42 = vld [vmem:[%s0 + $0x24] sm:$0xf]
  %v43 = vld [vmem:[%s0 + $0x28] sm:$0xf]
  %v44 = vld [vmem:[%s0 + $0x2c] sm:$0xf]
  %v45 = vld [vmem:[%s0 + $0x30] sm:$0xf]
  %v46 = vld [vmem:[%s0 + $0x34] sm:$0xf]
  %v47 = vld [vmem:[%s0 + $0x38] sm:$0xf]
  %v48 = vld [vmem:[%s0 + $0x3c] sm:$0xf]
  %v49 = vld [vmem:[%s1] sm:$0xff]
  %v50 = vld [vmem:[%s1 + $0x8] sm:$0xff]
  %v51 = vld [vmem:[%s1 + $0x10] sm:$0xff]
  %v52 = vld [vmem:[%s1 + $0x18] sm:$0xff]
  %v53 = vld [vmem:[%s1 + $0x20] sm:$0xff]
  %v54 = vld [vmem:[%s1 + $0x28] sm:$0xff]
  %v55 = vld [vmem:[%s1 + $0x30] sm:$0xff]
  %v56 = vld [vmem:[%s1 + $0x38] sm:$0xff]
  %v57 = vld [vmem:[%s1 + $0x40] sm:$0xff]
  %v58 = vld [vmem:[%s1 + $0x48] sm:$0xff]
  %v59 = vld [vmem:[%s1 + $0x50] sm:$0xff]
  %v60 = vld [vmem:[%s1 + $0x58] sm:$0xff]
  %v61 = vld [vmem:[%s1 + $0x60] sm:$0xff]
  %v62 = vld [vmem:[%s1 + $0x68] sm:$0xff]
  %v63 = vld [vmem:[%s1 + $0x70] sm:$0xff]
  %v64 = vld [vmem:[%s1 + $0x78] sm:$0xff]
  %v65 = vld [vmem:[%s1 + $0x80] sm:$0xff]
  %v66 = vld [vmem:[%s1 + $0x88] sm:$0xff]
  %v67 = vld [vmem:[%s1 + $0x90] sm:$0xff]
  %v68 = vld [vmem:[%s1 + $0x98] sm:$0xff]
  %v69 = vld [vmem:[%s1 + $0xa0] sm:$0xff]
  %v70 = vld [vmem:[%s1 + $0xa8] sm:$0xff]
  %v71 = vld [vmem:[%s1 + $0xb0] sm:$0xff]
  %v72 = vld [vmem:[%s1 + $0xb8] sm:$0xff]
  %v73 = vld [vmem:[%s1 + $0xc0] sm:$0xff]
  %v74 = vld [vmem:[%s1 + $0xc8] sm:$0xff]
  %v75 = vld [vmem:[%s1 + $0xd0] sm:$0xff]
  %v76 = vld [vmem:[%s1 + $0xd8] sm:$0xff]
  %v77 = vld [vmem:[%s1 + $0xe0] sm:$0xff]
  %v78 = vld [vmem:[%s1 + $0xe8] sm:$0xff]
  %v79 = vld [vmem:[%s1 + $0xf0] sm:$0xff]
  %v80 = vld [vmem:[%s1 + $0xf8] sm:$0xff]
  %v81 = vld [vmem:[%s1 + $0x100] sm:$0xff]
  %v82 = vld [vmem:[%s1 + $0x108] sm:$0xff]
  %v83 = vld [vmem:[%s1 + $0x110] sm:$0xff]
  %v84 = vld [vmem:[%s1 + $0x118] sm:$0xff]
  %v85 = vld [vmem:[%s1 + $0x120] sm:$0xff]
  %v86 = vld [vmem:[%s1 + $0x128] sm:$0xff]
  %v87 = vld [vmem:[%s1 + $0x130] sm:$0xff]
  %v88 = vld [vmem:[%s1 + $0x138] sm:$0xff]
  %v89 = vld [vmem:[%s1 + $0x140] sm:$0xff]
  %v90 = vld [vmem:[%s1 + $0x148] sm:$0xff]
  %v91 = vld [vmem:[%s1 + $0x150] sm:$0xff]
  %v92 = vld [vmem:[%s1 + $0x158] sm:$0xff]
  %v93 = vld [vmem:[%s1 + $0x160] sm:$0xff]
  %v94 = vld [vmem:[%s1 + $0x168] sm:$0xff]
  %v95 = vld [vmem:[%s1 + $0x170] sm:$0xff]
  %v96 = vld [vmem:[%s1 + $0x178] sm:$0xff]
  %v97 = vld [vmem:[%s1 + $0x180] sm:$0xff]
  %v98 = vld [vmem:[%s1 + $0x188] sm:$0xff]
  %v99 = vld [vmem:[%s1 + $0x190] sm:$0xff]
  %v100 = vld [vmem:[%s1 + $0x198] sm:$0xff]
  %v101 = vld [vmem:[%s1 + $0x1a0] sm:$0xff]
  %v102 = vld [vmem:[%s1 + $0x1a8] sm:$0xff]
  %v103 = vld [vmem:[%s1 + $0x1b0] sm:$0xff]
  %v104 = vld [vmem:[%s1 + $0x1b8] sm:$0xff]
  %v105 = vld [vmem:[%s1 + $0x1c0] sm:$0xff]
  %v106 = vld [vmem:[%s1 + $0x1c8] sm:$0xff]
  %v107 = vld [vmem:[%s1 + $0x1d0] sm:$0xff]
  %v108 = vld [vmem:[%s1 + $0x1d8] sm:$0xff]
  %v109 = vld [vmem:[%s1 + $0x1e0] sm:$0xff]
  %v110 = vld [vmem:[%s1 + $0x1e8] sm:$0xff]
  %v111 = vld [vmem:[%s1 + $0x1f0] sm:$0xff]
  %v112 = vld [vmem:[%s1 + $0x1f8] sm:$0xff]
  %v113 = vld [vmem:[%s2] sm:$0xff]
  %v115 = vlaneseq
  %v116 = vshrl.u32 %v115, 7
  %v117 = vsub.s32 0, %v116
  %v118 = vrot.slane %v113, %v117
  %v119 = vlaneseq
  %v120 = vshrl.u32 %v119, 7
  %v121 = vsub.s32 1, %v120
  %v122 = vrot.slane %v113, %v121
  %v123 = vlaneseq
  %v124 = vshrl.u32 %v123, 7
  %v125 = vsub.s32 2, %v124
  %v126 = vrot.slane %v113, %v125
  %v127 = vlaneseq
  %v128 = vshrl.u32 %v127, 7
  %v129 = vsub.s32 3, %v128
  %v130 = vrot.slane %v113, %v129
  %v131 = vlaneseq
  %v132 = vshrl.u32 %v131, 7
  %v133 = vsub.s32 4, %v132
  %v134 = vrot.slane %v113, %v133
  %v135 = vlaneseq
  %v136 = vshrl.u32 %v135, 7
  %v137 = vsub.s32 5, %v136
  %v138 = vrot.slane %v113, %v137
  %v139 = vlaneseq
  %v140 = vshrl.u32 %v139, 7
  %v141 = vsub.s32 6, %v140
  %v142 = vrot.slane %v113, %v141
  %v143 = vlaneseq
  %v144 = vshrl.u32 %v143, 7
  %v145 = vsub.s32 7, %v144
  %v146 = vrot.slane %v113, %v145
  %v171 = vunpack.c.l.b16 %v33
  %v172 = vunpack.c.l.b16 %v34
  %v173 = vunpack.c.l.b16 %v35
  %v174 = vunpack.c.l.b16 %v36
  %v175 = vunpack.c.l.b16 %v37
  %v176 = vunpack.c.l.b16 %v38
  %v177 = vunpack.c.l.b16 %v39
  %v178 = vunpack.c.l.b16 %v40
  %v179 = vunpack.c.l.b16 %v41
  %v180 = vunpack.c.l.b16 %v42
  %v181 = vunpack.c.l.b16 %v43
  %v182 = vunpack.c.l.b16 %v44
  %v183 = vunpack.c.l.b16 %v45
  %v184 = vunpack.c.l.b16 %v46
  %v185 = vunpack.c.l.b16 %v47
  %v186 = vunpack.c.l.b16 %v48
  %v187 = vpack.c.b16 %v172, %v171
  %v188 = vpack.c.b16 %v174, %v173
  %v189 = vpack.c.b16 %v176, %v175
  %v190 = vpack.c.b16 %v178, %v177
  %v191 = vpack.c.b16 %v180, %v179
  %v192 = vpack.c.b16 %v182, %v181
  %v193 = vpack.c.b16 %v184, %v183
  %v194 = vpack.c.b16 %v186, %v185
  %v267 = vunpack.c.l.b16 %v49
  %v268 = vunpack.c.h.b16 %v49
  %v269 = vunpack.c.l.b16 %v50
  %v270 = vunpack.c.h.b16 %v50
  %v271 = vunpack.c.l.b16 %v51
  %v272 = vunpack.c.h.b16 %v51
  %v273 = vunpack.c.l.b16 %v52
  %v274 = vunpack.c.h.b16 %v52
  %v275 = vunpack.c.l.b16 %v53
  %v276 = vunpack.c.h.b16 %v53
  %v277 = vunpack.c.l.b16 %v54
  %v278 = vunpack.c.h.b16 %v54
  %v279 = vunpack.c.l.b16 %v55
  %v280 = vunpack.c.h.b16 %v55
  %v281 = vunpack.c.l.b16 %v56
  %v282 = vunpack.c.h.b16 %v56
  %v283 = vunpack.c.l.b16 %v57
  %v284 = vunpack.c.h.b16 %v57
  %v285 = vunpack.c.l.b16 %v58
  %v286 = vunpack.c.h.b16 %v58
  %v287 = vunpack.c.l.b16 %v59
  %v288 = vunpack.c.h.b16 %v59
  %v289 = vunpack.c.l.b16 %v60
  %v290 = vunpack.c.h.b16 %v60
  %v291 = vunpack.c.l.b16 %v61
  %v292 = vunpack.c.h.b16 %v61
  %v293 = vunpack.c.l.b16 %v62
  %v294 = vunpack.c.h.b16 %v62
  %v295 = vunpack.c.l.b16 %v63
  %v296 = vunpack.c.h.b16 %v63
  %v297 = vunpack.c.l.b16 %v64
  %v298 = vunpack.c.h.b16 %v64
  %v299 = vunpack.c.l.b16 %v65
  %v300 = vunpack.c.h.b16 %v65
  %v301 = vunpack.c.l.b16 %v66
  %v302 = vunpack.c.h.b16 %v66
  %v303 = vunpack.c.l.b16 %v67
  %v304 = vunpack.c.h.b16 %v67
  %v305 = vunpack.c.l.b16 %v68
  %v306 = vunpack.c.h.b16 %v68
  %v307 = vunpack.c.l.b16 %v69
  %v308 = vunpack.c.h.b16 %v69
  %v309 = vunpack.c.l.b16 %v70
  %v310 = vunpack.c.h.b16 %v70
  %v311 = vunpack.c.l.b16 %v71
  %v312 = vunpack.c.h.b16 %v71
  %v313 = vunpack.c.l.b16 %v72
  %v314 = vunpack.c.h.b16 %v72
  %v315 = vunpack.c.l.b16 %v73
  %v316 = vunpack.c.h.b16 %v73
  %v317 = vunpack.c.l.b16 %v74
  %v318 = vunpack.c.h.b16 %v74
  %v319 = vunpack.c.l.b16 %v75
  %v320 = vunpack.c.h.b16 %v75
  %v321 = vunpack.c.l.b16 %v76
  %v322 = vunpack.c.h.b16 %v76
  %v323 = vunpack.c.l.b16 %v77
  %v324 = vunpack.c.h.b16 %v77
  %v325 = vunpack.c.l.b16 %v78
  %v326 = vunpack.c.h.b16 %v78
  %v327 = vunpack.c.l.b16 %v79
  %v328 = vunpack.c.h.b16 %v79
  %v329 = vunpack.c.l.b16 %v80
  %v330 = vunpack.c.h.b16 %v80
  %v331 = vunpack.c.l.b16 %v81
  %v332 = vunpack.c.h.b16 %v81
  %v333 = vunpack.c.l.b16 %v82
  %v334 = vunpack.c.h.b16 %v82
  %v335 = vunpack.c.l.b16 %v83
  %v336 = vunpack.c.h.b16 %v83
  %v337 = vunpack.c.l.b16 %v84
  %v338 = vunpack.c.h.b16 %v84
  %v339 = vunpack.c.l.b16 %v85
  %v340 = vunpack.c.h.b16 %v85
  %v341 = vunpack.c.l.b16 %v86
  %v342 = vunpack.c.h.b16 %v86
  %v343 = vunpack.c.l.b16 %v87
  %v344 = vunpack.c.h.b16 %v87
  %v345 = vunpack.c.l.b16 %v88
  %v346 = vunpack.c.h.b16 %v88
  %v347 = vunpack.c.l.b16 %v89
  %v348 = vunpack.c.h.b16 %v89
  %v349 = vunpack.c.l.b16 %v90
  %v350 = vunpack.c.h.b16 %v90
  %v351 = vunpack.c.l.b16 %v91
  %v352 = vunpack.c.h.b16 %v91
  %v353 = vunpack.c.l.b16 %v92
  %v354 = vunpack.c.h.b16 %v92
  %v355 = vunpack.c.l.b16 %v93
  %v356 = vunpack.c.h.b16 %v93
  %v357 = vunpack.c.l.b16 %v94
  %v358 = vunpack.c.h.b16 %v94
  %v359 = vunpack.c.l.b16 %v95
  %v360 = vunpack.c.h.b16 %v95
  %v361 = vunpack.c.l.b16 %v96
  %v362 = vunpack.c.h.b16 %v96
  %v363 = vunpack.c.l.b16 %v97
  %v364 = vunpack.c.h.b16 %v97
  %v365 = vunpack.c.l.b16 %v98
  %v366 = vunpack.c.h.b16 %v98
  %v367 = vunpack.c.l.b16 %v99
  %v368 = vunpack.c.h.b16 %v99
  %v369 = vunpack.c.l.b16 %v100
  %v370 = vunpack.c.h.b16 %v100
  %v371 = vunpack.c.l.b16 %v101
  %v372 = vunpack.c.h.b16 %v101
  %v373 = vunpack.c.l.b16 %v102
  %v374 = vunpack.c.h.b16 %v102
  %v375 = vunpack.c.l.b16 %v103
  %v376 = vunpack.c.h.b16 %v103
  %v377 = vunpack.c.l.b16 %v104
  %v378 = vunpack.c.h.b16 %v104
  %v379 = vunpack.c.l.b16 %v105
  %v380 = vunpack.c.h.b16 %v105
  %v381 = vunpack.c.l.b16 %v106
  %v382 = vunpack.c.h.b16 %v106
  %v383 = vunpack.c.l.b16 %v107
  %v384 = vunpack.c.h.b16 %v107
  %v385 = vunpack.c.l.b16 %v108
  %v386 = vunpack.c.h.b16 %v108
  %v387 = vunpack.c.l.b16 %v109
  %v388 = vunpack.c.h.b16 %v109
  %v389 = vunpack.c.l.b16 %v110
  %v390 = vunpack.c.h.b16 %v110
  %v391 = vunpack.c.l.b16 %v111
  %v392 = vunpack.c.h.b16 %v111
  %v393 = vunpack.c.l.b16 %v112
  %v394 = vunpack.c.h.b16 %v112
  %v395 = vpack.c.b16 %v275, %v267
  %v396 = vpack.c.b16 %v276, %v268
  %v397 = vpack.c.b16 %v277, %v269
  %v398 = vpack.c.b16 %v278, %v270
  %v399 = vpack.c.b16 %v279, %v271
  %v400 = vpack.c.b16 %v280, %v272
  %v401 = vpack.c.b16 %v281, %v273
  %v402 = vpack.c.b16 %v282, %v274
  %v403 = vpack.c.b16 %v291, %v283
  %v404 = vpack.c.b16 %v292, %v284
  %v405 = vpack.c.b16 %v293, %v285
  %v406 = vpack.c.b16 %v294, %v286
  %v407 = vpack.c.b16 %v295, %v287
  %v408 = vpack.c.b16 %v296, %v288
  %v409 = vpack.c.b16 %v297, %v289
  %v410 = vpack.c.b16 %v298, %v290
  %v411 = vpack.c.b16 %v307, %v299
  %v412 = vpack.c.b16 %v308, %v300
  %v413 = vpack.c.b16 %v309, %v301
  %v414 = vpack.c.b16 %v310, %v302
  %v415 = vpack.c.b16 %v311, %v303
  %v416 = vpack.c.b16 %v312, %v304
  %v417 = vpack.c.b16 %v313, %v305
  %v418 = vpack.c.b16 %v314, %v306
  %v419 = vpack.c.b16 %v323, %v315
  %v420 = vpack.c.b16 %v324, %v316
  %v421 = vpack.c.b16 %v325, %v317
  %v422 = vpack.c.b16 %v326, %v318
  %v423 = vpack.c.b16 %v327, %v319
  %v424 = vpack.c.b16 %v328, %v320
  %v425 = vpack.c.b16 %v329, %v321
  %v426 = vpack.c.b16 %v330, %v322
  %v427 = vpack.c.b16 %v339, %v331
  %v428 = vpack.c.b16 %v340, %v332
  %v429 = vpack.c.b16 %v341, %v333
  %v430 = vpack.c.b16 %v342, %v334
  %v431 = vpack.c.b16 %v343, %v335
  %v432 = vpack.c.b16 %v344, %v336
  %v433 = vpack.c.b16 %v345, %v337
  %v434 = vpack.c.b16 %v346, %v338
  %v435 = vpack.c.b16 %v355, %v347
  %v436 = vpack.c.b16 %v356, %v348
  %v437 = vpack.c.b16 %v357, %v349
  %v438 = vpack.c.b16 %v358, %v350
  %v439 = vpack.c.b16 %v359, %v351
  %v440 = vpack.c.b16 %v360, %v352
  %v441 = vpack.c.b16 %v361, %v353
  %v442 = vpack.c.b16 %v362, %v354
  %v443 = vpack.c.b16 %v371, %v363
  %v444 = vpack.c.b16 %v372, %v364
  %v445 = vpack.c.b16 %v373, %v365
  %v446 = vpack.c.b16 %v374, %v366
  %v447 = vpack.c.b16 %v375, %v367
  %v448 = vpack.c.b16 %v376, %v368
  %v449 = vpack.c.b16 %v377, %v369
  %v450 = vpack.c.b16 %v378, %v370
  %v451 = vpack.c.b16 %v387, %v379
  %v452 = vpack.c.b16 %v388, %v380
  %v453 = vpack.c.b16 %v389, %v381
  %v454 = vpack.c.b16 %v390, %v382
  %v455 = vpack.c.b16 %v391, %v383
  %v456 = vpack.c.b16 %v392, %v384
  %v457 = vpack.c.b16 %v393, %v385
  %v458 = vpack.c.b16 %v394, %v386
  %523 = vmatprep.subr.bf16.mxu0 %v396
  %524 = vmatpush1.bf16.msra.mxu0 %v395
  %525 = vmatprep.subr.bf16.mxu0 %v404
  %526 = vmatpush1.bf16.msra.mxu0 %v403
  %527 = vmatprep.subr.bf16.mxu0 %v412
  %528 = vmatpush1.bf16.msra.mxu0 %v411
  %529 = vmatprep.subr.bf16.mxu0 %v420
  %530 = vmatpush1.bf16.msra.mxu0 %v419
  %531 = vmatprep.subr.bf16.mxu0 %v428
  %532 = vmatpush1.bf16.msra.mxu0 %v427
  %533 = vmatprep.subr.bf16.mxu0 %v436
  %534 = vmatpush1.bf16.msra.mxu0 %v435
  %535 = vmatprep.subr.bf16.mxu0 %v444
  %536 = vmatpush1.bf16.msra.mxu0 %v443
  %537 = vmatprep.subr.bf16.mxu0 %v452
  %538 = vmatpush1.bf16.msra.mxu0 %v451
  %539 = vmatprep.subr.bf16.mxu0 0
  %540 = vmatpush1.bf16.msra.mxu0 0
  %541 = vmatprep.subr.bf16.mxu0 0
  %542 = vmatpush1.bf16.msra.mxu0 0
  %543 = vmatprep.subr.bf16.mxu0 0
  %544 = vmatpush1.bf16.msra.mxu0 0
  %545 = vmatprep.subr.bf16.mxu0 0
  %546 = vmatpush1.bf16.msra.mxu0 0
  %547 = vmatprep.subr.bf16.mxu0 0
  %548 = vmatpush1.bf16.msra.mxu0 0
  %549 = vmatprep.subr.bf16.mxu0 0
  %550 = vmatpush1.bf16.msra.mxu0 0
  %551 = vmatprep.subr.bf16.mxu0 0
  %552 = vmatpush1.bf16.msra.mxu0 0
  %553 = vmatprep.subr.bf16.mxu0 0
  %554 = vmatpush1.bf16.msra.mxu0 0
  %555 = vmatprep.mubr.bf16.mxu0 0
  %556 = vmatmul.mubr.bf16.gmra.mrb[0].mxu0 %v187
  %v557 = vpop.f32.mrb[0].mxu0
  %v558 = vadd.f32 %v118, %v557
  %v559 = vpop.f32.mrb[0].mxu0
  %v560 = vadd.f32 %v122, %v559
  %v561 = vpop.f32.mrb[0].mxu0
  %v562 = vadd.f32 %v118, %v561
  %v563 = vpop.f32.mrb[0].mxu0
  %v564 = vadd.f32 %v122, %v563
  %565 = vmatprep.mubr.bf16.mxu0 0
  %566 = vmatmul.mubr.bf16.gmra.mrb[0].mxu0 %v188
  %v567 = vpop.f32.mrb[0].mxu0
  %v568 = vadd.f32 %v118, %v567
  %v569 = vpop.f32.mrb[0].mxu0
  %v570 = vadd.f32 %v122, %v569
  %v571 = vpop.f32.mrb[0].mxu0
  %v572 = vadd.f32 %v118, %v571
  %v573 = vpop.f32.mrb[0].mxu0
  %v574 = vadd.f32 %v122, %v573
  %575 = vmatprep.mubr.bf16.mxu0 0
  %576 = vmatmul.mubr.bf16.gmra.mrb[0].mxu0 %v189
  %v577 = vpop.f32.mrb[0].mxu0
  %v578 = vadd.f32 %v118, %v577
  %v579 = vpop.f32.mrb[0].mxu0
  %v580 = vadd.f32 %v122, %v579
  %v581 = vpop.f32.mrb[0].mxu0
  %v582 = vadd.f32 %v118, %v581
  %v583 = vpop.f32.mrb[0].mxu0
  %v584 = vadd.f32 %v122, %v583
  %585 = vmatprep.mubr.bf16.mxu0 0
  %586 = vmatmul.mubr.bf16.gmra.mrb[0].mxu0 %v190
  %v587 = vpop.f32.mrb[0].mxu0
  %v588 = vadd.f32 %v118, %v587
  %v589 = vpop.f32.mrb[0].mxu0
  %v590 = vadd.f32 %v122, %v589
  %v591 = vpop.f32.mrb[0].mxu0
  %v592 = vadd.f32 %v118, %v591
  %v593 = vpop.f32.mrb[0].mxu0
  %v594 = vadd.f32 %v122, %v593
  %595 = vmatprep.mubr.bf16.mxu0 0
  %596 = vmatmul.mubr.bf16.gmra.mrb[0].mxu0 %v191
  %v597 = vpop.f32.mrb[0].mxu0
  %v598 = vadd.f32 %v118, %v597
  %v599 = vpop.f32.mrb[0].mxu0
  %v600 = vadd.f32 %v122, %v599
  %v601 = vpop.f32.mrb[0].mxu0
  %v602 = vadd.f32 %v118, %v601
  %v603 = vpop.f32.mrb[0].mxu0
  %v604 = vadd.f32 %v122, %v603
  %605 = vmatprep.mubr.bf16.mxu0 0
  %606 = vmatmul.mubr.bf16.gmra.mrb[0].mxu0 %v192
  %v607 = vpop.f32.mrb[0].mxu0
  %v608 = vadd.f32 %v118, %v607
  %v609 = vpop.f32.mrb[0].mxu0
  %v610 = vadd.f32 %v122, %v609
  %v611 = vpop.f32.mrb[0].mxu0
  %v612 = vadd.f32 %v118, %v611
  %v613 = vpop.f32.mrb[0].mxu0
  %v614 = vadd.f32 %v122, %v613
  %615 = vmatprep.mubr.bf16.mxu0 0
  %616 = vmatmul.mubr.bf16.gmra.mrb[0].mxu0 %v193
  %v617 = vpop.f32.mrb[0].mxu0
  %v618 = vadd.f32 %v118, %v617
  %v619 = vpop.f32.mrb[0].mxu0
  %v620 = vadd.f32 %v122, %v619
  %v621 = vpop.f32.mrb[0].mxu0
  %v622 = vadd.f32 %v118, %v621
  %v623 = vpop.f32.mrb[0].mxu0
  %v624 = vadd.f32 %v122, %v623
  %625 = vmatprep.mubr.bf16.mxu0 0
  %626 = vmatmul.mubr.bf16.gmra.mrb[0].mxu0 %v194
  %v627 = vpop.f32.mrb[0].mxu0
  %v628 = vadd.f32 %v118, %v627
  %v629 = vpop.f32.mrb[0].mxu0
  %v630 = vadd.f32 %v122, %v629
  %v631 = vpop.f32.mrb[0].mxu0
  %v632 = vadd.f32 %v118, %v631
  %v633 = vpop.f32.mrb[0].mxu0
  %v634 = vadd.f32 %v122, %v633
  %635 = vdwg.mxu0
  %636 = vmatprep.subr.bf16.mxu0 %v398
  %637 = vmatpush1.bf16.msra.mxu0 %v397
  %638 = vmatprep.subr.bf16.mxu0 %v406
  %639 = vmatpush1.bf16.msra.mxu0 %v405
  %640 = vmatprep.subr.bf16.mxu0 %v414
  %641 = vmatpush1.bf16.msra.mxu0 %v413
  %642 = vmatprep.subr.bf16.mxu0 %v422
  %643 = vmatpush1.bf16.msra.mxu0 %v421
  %644 = vmatprep.subr.bf16.mxu0 %v430
  %645 = vmatpush1.bf16.msra.mxu0 %v429
  %646 = vmatprep.subr.bf16.mxu0 %v438
  %647 = vmatpush1.bf16.msra.mxu0 %v437
  %648 = vmatprep.subr.bf16.mxu0 %v446
  %649 = vmatpush1.bf16.msra.mxu0 %v445
  %650 = vmatprep.subr.bf16.mxu0 %v454
  %651 = vmatpush1.bf16.msra.mxu0 %v453
  %652 = vmatprep.subr.bf16.mxu0 0
  %653 = vmatpush1.bf16.msra.mxu0 0
  %654 = vmatprep.subr.bf16.mxu0 0
  %655 = vmatpush1.bf16.msra.mxu0 0
  %656 = vmatprep.subr.bf16.mxu0 0
  %657 = vmatpush1.bf16.msra.mxu0 0
  %658 = vmatprep.subr.bf16.mxu0 0
  %659 = vmatpush1.bf16.msra.mxu0 0
  %660 = vmatprep.subr.bf16.mxu0 0
  %661 = vmatpush1.bf16.msra.mxu0 0
  %662 = vmatprep.subr.bf16.mxu0 0
  %663 = vmatpush1.bf16.msra.mxu0 0
  %664 = vmatprep.subr.bf16.mxu0 0
  %665 = vmatpush1.bf16.msra.mxu0 0
  %666 = vmatprep.subr.bf16.mxu0 0
  %667 = vmatpush1.bf16.msra.mxu0 0
  %668 = vmatprep.mubr.bf16.mxu0 0
  %669 = vmatmul.mubr.bf16.gmra.mrb[0].mxu0 %v187
  %v670 = vpop.f32.mrb[0].mxu0
  %v671 = vadd.f32 %v126, %v670
  %v672 = vpop.f32.mrb[0].mxu0
  %v673 = vadd.f32 %v130, %v672
  %v674 = vpop.f32.mrb[0].mxu0
  %v675 = vadd.f32 %v126, %v674
  %v676 = vpop.f32.mrb[0].mxu0
  %v677 = vadd.f32 %v130, %v676
  %678 = vmatprep.mubr.bf16.mxu0 0
  %679 = vmatmul.mubr.bf16.gmra.mrb[0].mxu0 %v188
  %v680 = vpop.f32.mrb[0].mxu0
  %v681 = vadd.f32 %v126, %v680
  %v682 = vpop.f32.mrb[0].mxu0
  %v683 = vadd.f32 %v130, %v682
  %v684 = vpop.f32.mrb[0].mxu0
  %v685 = vadd.f32 %v126, %v684
  %v686 = vpop.f32.mrb[0].mxu0
  %v687 = vadd.f32 %v130, %v686
  %688 = vmatprep.mubr.bf16.mxu0 0
  %689 = vmatmul.mubr.bf16.gmra.mrb[0].mxu0 %v189
  %v690 = vpop.f32.mrb[0].mxu0
  %v691 = vadd.f32 %v126, %v690
  %v692 = vpop.f32.mrb[0].mxu0
  %v693 = vadd.f32 %v130, %v692
  %v694 = vpop.f32.mrb[0].mxu0
  %v695 = vadd.f32 %v126, %v694
  %v696 = vpop.f32.mrb[0].mxu0
  %v697 = vadd.f32 %v130, %v696
  %698 = vmatprep.mubr.bf16.mxu0 0
  %699 = vmatmul.mubr.bf16.gmra.mrb[0].mxu0 %v190
  %v700 = vpop.f32.mrb[0].mxu0
  %v701 = vadd.f32 %v126, %v700
  %v702 = vpop.f32.mrb[0].mxu0
  %v703 = vadd.f32 %v130, %v702
  %v704 = vpop.f32.mrb[0].mxu0
  %v705 = vadd.f32 %v126, %v704
  %v706 = vpop.f32.mrb[0].mxu0
  %v707 = vadd.f32 %v130, %v706
  %708 = vmatprep.mubr.bf16.mxu0 0
  %709 = vmatmul.mubr.bf16.gmra.mrb[0].mxu0 %v191
  %v710 = vpop.f32.mrb[0].mxu0
  %v711 = vadd.f32 %v126, %v710
  %v712 = vpop.f32.mrb[0].mxu0
  %v713 = vadd.f32 %v130, %v712
  %v714 = vpop.f32.mrb[0].mxu0
  %v715 = vadd.f32 %v126, %v714
  %v716 = vpop.f32.mrb[0].mxu0
  %v717 = vadd.f32 %v130, %v716
  %718 = vmatprep.mubr.bf16.mxu0 0
  %719 = vmatmul.mubr.bf16.gmra.mrb[0].mxu0 %v192
  %v720 = vpop.f32.mrb[0].mxu0
  %v721 = vadd.f32 %v126, %v720
  %v722 = vpop.f32.mrb[0].mxu0
  %v723 = vadd.f32 %v130, %v722
  %v724 = vpop.f32.mrb[0].mxu0
  %v725 = vadd.f32 %v126, %v724
  %v726 = vpop.f32.mrb[0].mxu0
  %v727 = vadd.f32 %v130, %v726
  %728 = vmatprep.mubr.bf16.mxu0 0
  %729 = vmatmul.mubr.bf16.gmra.mrb[0].mxu0 %v193
  %v730 = vpop.f32.mrb[0].mxu0
  %v731 = vadd.f32 %v126, %v730
  %v732 = vpop.f32.mrb[0].mxu0
  %v733 = vadd.f32 %v130, %v732
  %v734 = vpop.f32.mrb[0].mxu0
  %v735 = vadd.f32 %v126, %v734
  %v736 = vpop.f32.mrb[0].mxu0
  %v737 = vadd.f32 %v130, %v736
  %738 = vmatprep.mubr.bf16.mxu0 0
  %739 = vmatmul.mubr.bf16.gmra.mrb[0].mxu0 %v194
  %v740 = vpop.f32.mrb[0].mxu0
  %v741 = vadd.f32 %v126, %v740
  %v742 = vpop.f32.mrb[0].mxu0
  %v743 = vadd.f32 %v130, %v742
  %v744 = vpop.f32.mrb[0].mxu0
  %v745 = vadd.f32 %v126, %v744
  %v746 = vpop.f32.mrb[0].mxu0
  %v747 = vadd.f32 %v130, %v746
  %748 = vdwg.mxu0
  %749 = vmatprep.subr.bf16.mxu0 %v400
  %750 = vmatpush1.bf16.msra.mxu0 %v399
  %751 = vmatprep.subr.bf16.mxu0 %v408
  %752 = vmatpush1.bf16.msra.mxu0 %v407
  %753 = vmatprep.subr.bf16.mxu0 %v416
  %754 = vmatpush1.bf16.msra.mxu0 %v415
  %755 = vmatprep.subr.bf16.mxu0 %v424
  %756 = vmatpush1.bf16.msra.mxu0 %v423
  %757 = vmatprep.subr.bf16.mxu0 %v432
  %758 = vmatpush1.bf16.msra.mxu0 %v431
  %759 = vmatprep.subr.bf16.mxu0 %v440
  %760 = vmatpush1.bf16.msra.mxu0 %v439
  %761 = vmatprep.subr.bf16.mxu0 %v448
  %762 = vmatpush1.bf16.msra.mxu0 %v447
  %763 = vmatprep.subr.bf16.mxu0 %v456
  %764 = vmatpush1.bf16.msra.mxu0 %v455
  %765 = vmatprep.subr.bf16.mxu0 0
  %766 = vmatpush1.bf16.msra.mxu0 0
  %767 = vmatprep.subr.bf16.mxu0 0
  %768 = vmatpush1.bf16.msra.mxu0 0
  %769 = vmatprep.subr.bf16.mxu0 0
  %770 = vmatpush1.bf16.msra.mxu0 0
  %771 = vmatprep.subr.bf16.mxu0 0
  %772 = vmatpush1.bf16.msra.mxu0 0
  %773 = vmatprep.subr.bf16.mxu0 0
  %774 = vmatpush1.bf16.msra.mxu0 0
  %775 = vmatprep.subr.bf16.mxu0 0
  %776 = vmatpush1.bf16.msra.mxu0 0
  %777 = vmatprep.subr.bf16.mxu0 0
  %778 = vmatpush1.bf16.msra.mxu0 0
  %779 = vmatprep.subr.bf16.mxu0 0
  %780 = vmatpush1.bf16.msra.mxu0 0
  %781 = vmatprep.mubr.bf16.mxu0 0
  %782 = vmatmul.mubr.bf16.gmra.mrb[0].mxu0 %v187
  %v783 = vpop.f32.mrb[0].mxu0
  %v784 = vadd.f32 %v134, %v783
  %v785 = vpop.f32.mrb[0].mxu0
  %v786 = vadd.f32 %v138, %v785
  %v787 = vpop.f32.mrb[0].mxu0
  %v788 = vadd.f32 %v134, %v787
  %v789 = vpop.f32.mrb[0].mxu0
  %v790 = vadd.f32 %v138, %v789
  %791 = vmatprep.mubr.bf16.mxu0 0
  %792 = vmatmul.mubr.bf16.gmra.mrb[0].mxu0 %v188
  %v793 = vpop.f32.mrb[0].mxu0
  %v794 = vadd.f32 %v134, %v793
  %v795 = vpop.f32.mrb[0].mxu0
  %v796 = vadd.f32 %v138, %v795
  %v797 = vpop.f32.mrb[0].mxu0
  %v798 = vadd.f32 %v134, %v797
  %v799 = vpop.f32.mrb[0].mxu0
  %v800 = vadd.f32 %v138, %v799
  %801 = vmatprep.mubr.bf16.mxu0 0
  %802 = vmatmul.mubr.bf16.gmra.mrb[0].mxu0 %v189
  %v803 = vpop.f32.mrb[0].mxu0
  %v804 = vadd.f32 %v134, %v803
  %v805 = vpop.f32.mrb[0].mxu0
  %v806 = vadd.f32 %v138, %v805
  %v807 = vpop.f32.mrb[0].mxu0
  %v808 = vadd.f32 %v134, %v807
  %v809 = vpop.f32.mrb[0].mxu0
  %v810 = vadd.f32 %v138, %v809
  %811 = vmatprep.mubr.bf16.mxu0 0
  %812 = vmatmul.mubr.bf16.gmra.mrb[0].mxu0 %v190
  %v813 = vpop.f32.mrb[0].mxu0
  %v814 = vadd.f32 %v134, %v813
  %v815 = vpop.f32.mrb[0].mxu0
  %v816 = vadd.f32 %v138, %v815
  %v817 = vpop.f32.mrb[0].mxu0
  %v818 = vadd.f32 %v134, %v817
  %v819 = vpop.f32.mrb[0].mxu0
  %v820 = vadd.f32 %v138, %v819
  %821 = vmatprep.mubr.bf16.mxu0 0
  %822 = vmatmul.mubr.bf16.gmra.mrb[0].mxu0 %v191
  %v823 = vpop.f32.mrb[0].mxu0
  %v824 = vadd.f32 %v134, %v823
  %v825 = vpop.f32.mrb[0].mxu0
  %v826 = vadd.f32 %v138, %v825
  %v827 = vpop.f32.mrb[0].mxu0
  %v828 = vadd.f32 %v134, %v827
  %v829 = vpop.f32.mrb[0].mxu0
  %v830 = vadd.f32 %v138, %v829
  %831 = vmatprep.mubr.bf16.mxu0 0
  %832 = vmatmul.mubr.bf16.gmra.mrb[0].mxu0 %v192
  %v833 = vpop.f32.mrb[0].mxu0
  %v834 = vadd.f32 %v134, %v833
  %v835 = vpop.f32.mrb[0].mxu0
  %v836 = vadd.f32 %v138, %v835
  %v837 = vpop.f32.mrb[0].mxu0
  %v838 = vadd.f32 %v134, %v837
  %v839 = vpop.f32.mrb[0].mxu0
  %v840 = vadd.f32 %v138, %v839
  %841 = vmatprep.mubr.bf16.mxu0 0
  %842 = vmatmul.mubr.bf16.gmra.mrb[0].mxu0 %v193
  %v843 = vpop.f32.mrb[0].mxu0
  %v844 = vadd.f32 %v134, %v843
  %v845 = vpop.f32.mrb[0].mxu0
  %v846 = vadd.f32 %v138, %v845
  %v847 = vpop.f32.mrb[0].mxu0
  %v848 = vadd.f32 %v134, %v847
  %v849 = vpop.f32.mrb[0].mxu0
  %v850 = vadd.f32 %v138, %v849
  %851 = vmatprep.mubr.bf16.mxu0 0
  %852 = vmatmul.mubr.bf16.gmra.mrb[0].mxu0 %v194
  %v853 = vpop.f32.mrb[0].mxu0
  %v854 = vadd.f32 %v134, %v853
  %v855 = vpop.f32.mrb[0].mxu0
  %v856 = vadd.f32 %v138, %v855
  %v857 = vpop.f32.mrb[0].mxu0
  %v858 = vadd.f32 %v134, %v857
  %v859 = vpop.f32.mrb[0].mxu0
  %v860 = vadd.f32 %v138, %v859
  %861 = vdwg.mxu0
  %862 = vmatprep.subr.bf16.mxu0 %v402
  %863 = vmatpush1.bf16.msra.mxu0 %v401
  %864 = vmatprep.subr.bf16.mxu0 %v410
  %865 = vmatpush1.bf16.msra.mxu0 %v409
  %866 = vmatprep.subr.bf16.mxu0 %v418
  %867 = vmatpush1.bf16.msra.mxu0 %v417
  %868 = vmatprep.subr.bf16.mxu0 %v426
  %869 = vmatpush1.bf16.msra.mxu0 %v425
  %870 = vmatprep.subr.bf16.mxu0 %v434
  %871 = vmatpush1.bf16.msra.mxu0 %v433
  %872 = vmatprep.subr.bf16.mxu0 %v442
  %873 = vmatpush1.bf16.msra.mxu0 %v441
  %874 = vmatprep.subr.bf16.mxu0 %v450
  %875 = vmatpush1.bf16.msra.mxu0 %v449
  %876 = vmatprep.subr.bf16.mxu0 %v458
  %877 = vmatpush1.bf16.msra.mxu0 %v457
  %878 = vmatprep.subr.bf16.mxu0 0
  %879 = vmatpush1.bf16.msra.mxu0 0
  %880 = vmatprep.subr.bf16.mxu0 0
  %881 = vmatpush1.bf16.msra.mxu0 0
  %882 = vmatprep.subr.bf16.mxu0 0
  %883 = vmatpush1.bf16.msra.mxu0 0
  %884 = vmatprep.subr.bf16.mxu0 0
  %885 = vmatpush1.bf16.msra.mxu0 0
  %886 = vmatprep.subr.bf16.mxu0 0
  %887 = vmatpush1.bf16.msra.mxu0 0
  %888 = vmatprep.subr.bf16.mxu0 0
  %889 = vmatpush1.bf16.msra.mxu0 0
  %890 = vmatprep.subr.bf16.mxu0 0
  %891 = vmatpush1.bf16.msra.mxu0 0
  %892 = vmatprep.subr.bf16.mxu0 0
  %893 = vmatpush1.bf16.msra.mxu0 0
  %894 = vmatprep.mubr.bf16.mxu0 0
  %895 = vmatmul.mubr.bf16.gmra.mrb[0].mxu0 %v187
  %v896 = vpop.f32.mrb[0].mxu0
  %v897 = vadd.f32 %v142, %v896
  %v898 = vpop.f32.mrb[0].mxu0
  %v899 = vadd.f32 %v146, %v898
  %v900 = vpop.f32.mrb[0].mxu0
  %v901 = vadd.f32 %v142, %v900
  %v902 = vpop.f32.mrb[0].mxu0
  %v903 = vadd.f32 %v146, %v902
  %904 = vmatprep.mubr.bf16.mxu0 0
  %905 = vmatmul.mubr.bf16.gmra.mrb[0].mxu0 %v188
  %v906 = vpop.f32.mrb[0].mxu0
  %v907 = vadd.f32 %v142, %v906
  %v908 = vpop.f32.mrb[0].mxu0
  %v909 = vadd.f32 %v146, %v908
  %v910 = vpop.f32.mrb[0].mxu0
  %v911 = vadd.f32 %v142, %v910
  %v912 = vpop.f32.mrb[0].mxu0
  %v913 = vadd.f32 %v146, %v912
  %914 = vmatprep.mubr.bf16.mxu0 0
  %915 = vmatmul.mubr.bf16.gmra.mrb[0].mxu0 %v189
  %v916 = vpop.f32.mrb[0].mxu0
  %v917 = vadd.f32 %v142, %v916
  %v918 = vpop.f32.mrb[0].mxu0
  %v919 = vadd.f32 %v146, %v918
  %v920 = vpop.f32.mrb[0].mxu0
  %v921 = vadd.f32 %v142, %v920
  %v922 = vpop.f32.mrb[0].mxu0
  %v923 = vadd.f32 %v146, %v922
  %924 = vmatprep.mubr.bf16.mxu0 0
  %925 = vmatmul.mubr.bf16.gmra.mrb[0].mxu0 %v190
  %v926 = vpop.f32.mrb[0].mxu0
  %v927 = vadd.f32 %v142, %v926
  %v928 = vpop.f32.mrb[0].mxu0
  %v929 = vadd.f32 %v146, %v928
  %v930 = vpop.f32.mrb[0].mxu0
  %v931 = vadd.f32 %v142, %v930
  %v932 = vpop.f32.mrb[0].mxu0
  %v933 = vadd.f32 %v146, %v932
  %934 = vmatprep.mubr.bf16.mxu0 0
  %935 = vmatmul.mubr.bf16.gmra.mrb[0].mxu0 %v191
  %v936 = vpop.f32.mrb[0].mxu0
  %v937 = vadd.f32 %v142, %v936
  %v938 = vpop.f32.mrb[0].mxu0
  %v939 = vadd.f32 %v146, %v938
  %v940 = vpop.f32.mrb[0].mxu0
  %v941 = vadd.f32 %v142, %v940
  %v942 = vpop.f32.mrb[0].mxu0
  %v943 = vadd.f32 %v146, %v942
  %944 = vmatprep.mubr.bf16.mxu0 0
  %945 = vmatmul.mubr.bf16.gmra.mrb[0].mxu0 %v192
  %v946 = vpop.f32.mrb[0].mxu0
  %v947 = vadd.f32 %v142, %v946
  %v948 = vpop.f32.mrb[0].mxu0
  %v949 = vadd.f32 %v146, %v948
  %v950 = vpop.f32.mrb[0].mxu0
  %v951 = vadd.f32 %v142, %v950
  %v952 = vpop.f32.mrb[0].mxu0
  %v953 = vadd.f32 %v146, %v952
  %954 = vmatprep.mubr.bf16.mxu0 0
  %955 = vmatmul.mubr.bf16.gmra.mrb[0].mxu0 %v193
  %v956 = vpop.f32.mrb[0].mxu0
  %v957 = vadd.f32 %v142, %v956
  %v958 = vpop.f32.mrb[0].mxu0
  %v959 = vadd.f32 %v146, %v958
  %v960 = vpop.f32.mrb[0].mxu0
  %v961 = vadd.f32 %v142, %v960
  %v962 = vpop.f32.mrb[0].mxu0
  %v963 = vadd.f32 %v146, %v962
  %964 = vmatprep.mubr.bf16.mxu0 0
  %965 = vmatmul.mubr.bf16.gmra.mrb[0].mxu0 %v194
  %v966 = vpop.f32.mrb[0].mxu0
  %v967 = vadd.f32 %v142, %v966
  %v968 = vpop.f32.mrb[0].mxu0
  %v969 = vadd.f32 %v146, %v968
  %v970 = vpop.f32.mrb[0].mxu0
  %v971 = vadd.f32 %v142, %v970
  %v972 = vpop.f32.mrb[0].mxu0
  %v973 = vadd.f32 %v146, %v972
  %974 = vdwg.mxu0
  %v975 = vmax.f32 %v558, 0.0
  %v976 = vmax.f32 %v560, 0.0
  %v977 = vmax.f32 %v671, 0.0
  %v978 = vmax.f32 %v673, 0.0
  %v979 = vmax.f32 %v784, 0.0
  %v980 = vmax.f32 %v786, 0.0
  %v981 = vmax.f32 %v897, 0.0
  %v982 = vmax.f32 %v899, 0.0
  %v983 = vmax.f32 %v562, 0.0
  %v984 = vmax.f32 %v564, 0.0
  %v985 = vmax.f32 %v675, 0.0
  %v986 = vmax.f32 %v677, 0.0
  %v987 = vmax.f32 %v788, 0.0
  %v988 = vmax.f32 %v790, 0.0
  %v989 = vmax.f32 %v901, 0.0
  %v990 = vmax.f32 %v903, 0.0
  %v991 = vmax.f32 %v568, 0.0
  %v992 = vmax.f32 %v570, 0.0
  %v993 = vmax.f32 %v681, 0.0
  %v994 = vmax.f32 %v683, 0.0
  %v995 = vmax.f32 %v794, 0.0
  %v996 = vmax.f32 %v796, 0.0
  %v997 = vmax.f32 %v907, 0.0
  %v998 = vmax.f32 %v909, 0.0
  %v999 = vmax.f32 %v572, 0.0
  %v1000 = vmax.f32 %v574, 0.0
  %v1001 = vmax.f32 %v685, 0.0
  %v1002 = vmax.f32 %v687, 0.0
  %v1003 = vmax.f32 %v798, 0.0
  %v1004 = vmax.f32 %v800, 0.0
  %v1005 = vmax.f32 %v911, 0.0
  %v1006 = vmax.f32 %v913, 0.0
  %v1007 = vmax.f32 %v578, 0.0
  %v1008 = vmax.f32 %v580, 0.0
  %v1009 = vmax.f32 %v691, 0.0
  %v1010 = vmax.f32 %v693, 0.0
  %v1011 = vmax.f32 %v804, 0.0
  %v1012 = vmax.f32 %v806, 0.0
  %v1013 = vmax.f32 %v917, 0.0
  %v1014 = vmax.f32 %v919, 0.0
  %v1015 = vmax.f32 %v582, 0.0
  %v1016 = vmax.f32 %v584, 0.0
  %v1017 = vmax.f32 %v695, 0.0
  %v1018 = vmax.f32 %v697, 0.0
  %v1019 = vmax.f32 %v808, 0.0
  %v1020 = vmax.f32 %v810, 0.0
  %v1021 = vmax.f32 %v921, 0.0
  %v1022 = vmax.f32 %v923, 0.0
  %v1023 = vmax.f32 %v588, 0.0
  %v1024 = vmax.f32 %v590, 0.0
  %v1025 = vmax.f32 %v701, 0.0
  %v1026 = vmax.f32 %v703, 0.0
  %v1027 = vmax.f32 %v814, 0.0
  %v1028 = vmax.f32 %v816, 0.0
  %v1029 = vmax.f32 %v927, 0.0
  %v1030 = vmax.f32 %v929, 0.0
  %v1031 = vmax.f32 %v592, 0.0
  %v1032 = vmax.f32 %v594, 0.0
  %v1033 = vmax.f32 %v705, 0.0
  %v1034 = vmax.f32 %v707, 0.0
  %v1035 = vmax.f32 %v818, 0.0
  %v1036 = vmax.f32 %v820, 0.0
  %v1037 = vmax.f32 %v931, 0.0
  %v1038 = vmax.f32 %v933, 0.0
  %v1039 = vmax.f32 %v598, 0.0
  %v1040 = vmax.f32 %v600, 0.0
  %v1041 = vmax.f32 %v711, 0.0
  %v1042 = vmax.f32 %v713, 0.0
  %v1043 = vmax.f32 %v824, 0.0
  %v1044 = vmax.f32 %v826, 0.0
  %v1045 = vmax.f32 %v937, 0.0
  %v1046 = vmax.f32 %v939, 0.0
  %v1047 = vmax.f32 %v602, 0.0
  %v1048 = vmax.f32 %v604, 0.0
  %v1049 = vmax.f32 %v715, 0.0
  %v1050 = vmax.f32 %v717, 0.0
  %v1051 = vmax.f32 %v828, 0.0
  %v1052 = vmax.f32 %v830, 0.0
  %v1053 = vmax.f32 %v941, 0.0
  %v1054 = vmax.f32 %v943, 0.0
  %v1055 = vmax.f32 %v608, 0.0
  %v1056 = vmax.f32 %v610, 0.0
  %v1057 = vmax.f32 %v721, 0.0
  %v1058 = vmax.f32 %v723, 0.0
  %v1059 = vmax.f32 %v834, 0.0
  %v1060 = vmax.f32 %v836, 0.0
  %v1061 = vmax.f32 %v947, 0.0
  %v1062 = vmax.f32 %v949, 0.0
  %v1063 = vmax.f32 %v612, 0.0
  %v1064 = vmax.f32 %v614, 0.0
  %v1065 = vmax.f32 %v725, 0.0
  %v1066 = vmax.f32 %v727, 0.0
  %v1067 = vmax.f32 %v838, 0.0
  %v1068 = vmax.f32 %v840, 0.0
  %v1069 = vmax.f32 %v951, 0.0
  %v1070 = vmax.f32 %v953, 0.0
  %v1071 = vmax.f32 %v618, 0.0
  %v1072 = vmax.f32 %v620, 0.0
  %v1073 = vmax.f32 %v731, 0.0
  %v1074 = vmax.f32 %v733, 0.0
  %v1075 = vmax.f32 %v844, 0.0
  %v1076 = vmax.f32 %v846, 0.0
  %v1077 = vmax.f32 %v957, 0.0
  %v1078 = vmax.f32 %v959, 0.0
  %v1079 = vmax.f32 %v622, 0.0
  %v1080 = vmax.f32 %v624, 0.0
  %v1081 = vmax.f32 %v735, 0.0
  %v1082 = vmax.f32 %v737, 0.0
  %v1083 = vmax.f32 %v848, 0.0
  %v1084 = vmax.f32 %v850, 0.0
  %v1085 = vmax.f32 %v961, 0.0
  %v1086 = vmax.f32 %v963, 0.0
  %v1087 = vmax.f32 %v628, 0.0
  %v1088 = vmax.f32 %v630, 0.0
  %v1089 = vmax.f32 %v741, 0.0
  %v1090 = vmax.f32 %v743, 0.0
  %v1091 = vmax.f32 %v854, 0.0
  %v1092 = vmax.f32 %v856, 0.0
  %v1093 = vmax.f32 %v967, 0.0
  %v1094 = vmax.f32 %v969, 0.0
  %v1095 = vmax.f32 %v632, 0.0
  %v1096 = vmax.f32 %v634, 0.0
  %v1097 = vmax.f32 %v745, 0.0
  %v1098 = vmax.f32 %v747, 0.0
  %v1099 = vmax.f32 %v858, 0.0
  %v1100 = vmax.f32 %v860, 0.0
  %v1101 = vmax.f32 %v971, 0.0
  %v1102 = vmax.f32 %v973, 0.0
  %v1103 = vpack.c.bf16 %v983, %v975
  %v1104 = vpack.c.bf16 %v984, %v976
  %v1105 = vpack.c.bf16 %v985, %v977
  %v1106 = vpack.c.bf16 %v986, %v978
  %v1107 = vpack.c.bf16 %v987, %v979
  %v1108 = vpack.c.bf16 %v988, %v980
  %v1109 = vpack.c.bf16 %v989, %v981
  %v1110 = vpack.c.bf16 %v990, %v982
  %v1111 = vpack.c.bf16 %v999, %v991
  %v1112 = vpack.c.bf16 %v1000, %v992
  %v1113 = vpack.c.bf16 %v1001, %v993
  %v1114 = vpack.c.bf16 %v1002, %v994
  %v1115 = vpack.c.bf16 %v1003, %v995
  %v1116 = vpack.c.bf16 %v1004, %v996
  %v1117 = vpack.c.bf16 %v1005, %v997
  %v1118 = vpack.c.bf16 %v1006, %v998
  %v1119 = vpack.c.bf16 %v1015, %v1007
  %v1120 = vpack.c.bf16 %v1016, %v1008
  %v1121 = vpack.c.bf16 %v1017, %v1009
  %v1122 = vpack.c.bf16 %v1018, %v1010
  %v1123 = vpack.c.bf16 %v1019, %v1011
  %v1124 = vpack.c.bf16 %v1020, %v1012
  %v1125 = vpack.c.bf16 %v1021, %v1013
  %v1126 = vpack.c.bf16 %v1022, %v1014
  %v1127 = vpack.c.bf16 %v1031, %v1023
  %v1128 = vpack.c.bf16 %v1032, %v1024
  %v1129 = vpack.c.bf16 %v1033, %v1025
  %v1130 = vpack.c.bf16 %v1034, %v1026
  %v1131 = vpack.c.bf16 %v1035, %v1027
  %v1132 = vpack.c.bf16 %v1036, %v1028
  %v1133 = vpack.c.bf16 %v1037, %v1029
  %v1134 = vpack.c.bf16 %v1038, %v1030
  %v1135 = vpack.c.bf16 %v1047, %v1039
  %v1136 = vpack.c.bf16 %v1048, %v1040
  %v1137 = vpack.c.bf16 %v1049, %v1041
  %v1138 = vpack.c.bf16 %v1050, %v1042
  %v1139 = vpack.c.bf16 %v1051, %v1043
  %v1140 = vpack.c.bf16 %v1052, %v1044
  %v1141 = vpack.c.bf16 %v1053, %v1045
  %v1142 = vpack.c.bf16 %v1054, %v1046
  %v1143 = vpack.c.bf16 %v1063, %v1055
  %v1144 = vpack.c.bf16 %v1064, %v1056
  %v1145 = vpack.c.bf16 %v1065, %v1057
  %v1146 = vpack.c.bf16 %v1066, %v1058
  %v1147 = vpack.c.bf16 %v1067, %v1059
  %v1148 = vpack.c.bf16 %v1068, %v1060
  %v1149 = vpack.c.bf16 %v1069, %v1061
  %v1150 = vpack.c.bf16 %v1070, %v1062
  %v1151 = vpack.c.bf16 %v1079, %v1071
  %v1152 = vpack.c.bf16 %v1080, %v1072
  %v1153 = vpack.c.bf16 %v1081, %v1073
  %v1154 = vpack.c.bf16 %v1082, %v1074
  %v1155 = vpack.c.bf16 %v1083, %v1075
  %v1156 = vpack.c.bf16 %v1084, %v1076
  %v1157 = vpack.c.bf16 %v1085, %v1077
  %v1158 = vpack.c.bf16 %v1086, %v1078
  %v1159 = vpack.c.bf16 %v1095, %v1087
  %v1160 = vpack.c.bf16 %v1096, %v1088
  %v1161 = vpack.c.bf16 %v1097, %v1089
  %v1162 = vpack.c.bf16 %v1098, %v1090
  %v1163 = vpack.c.bf16 %v1099, %v1091
  %v1164 = vpack.c.bf16 %v1100, %v1092
  %v1165 = vpack.c.bf16 %v1101, %v1093
  %v1166 = vpack.c.bf16 %v1102, %v1094
  %v1167 = vld [vmem:[%s3] sm:$0xf]
  %v1168 = vld [vmem:[%s3 + $0x4] sm:$0xf]
  %v1169 = vld [vmem:[%s3 + $0x8] sm:$0xf]
  %v1170 = vld [vmem:[%s3 + $0xc] sm:$0xf]
  %v1171 = vld [vmem:[%s3 + $0x10] sm:$0xf]
  %v1172 = vld [vmem:[%s3 + $0x14] sm:$0xf]
  %v1173 = vld [vmem:[%s3 + $0x18] sm:$0xf]
  %v1174 = vld [vmem:[%s3 + $0x1c] sm:$0xf]
  %v1175 = vld [vmem:[%s3 + $0x20] sm:$0xf]
  %v1176 = vld [vmem:[%s3 + $0x24] sm:$0xf]
  %v1177 = vld [vmem:[%s3 + $0x28] sm:$0xf]
  %v1178 = vld [vmem:[%s3 + $0x2c] sm:$0xf]
  %v1179 = vld [vmem:[%s3 + $0x30] sm:$0xf]
  %v1180 = vld [vmem:[%s3 + $0x34] sm:$0xf]
  %v1181 = vld [vmem:[%s3 + $0x38] sm:$0xf]
  %v1182 = vld [vmem:[%s3 + $0x3c] sm:$0xf]
  %v1183 = vld [vmem:[%s3 + $0x40] sm:$0xf]
  %v1184 = vld [vmem:[%s3 + $0x44] sm:$0xf]
  %v1185 = vld [vmem:[%s3 + $0x48] sm:$0xf]
  %v1186 = vld [vmem:[%s3 + $0x4c] sm:$0xf]
  %v1187 = vld [vmem:[%s3 + $0x50] sm:$0xf]
  %v1188 = vld [vmem:[%s3 + $0x54] sm:$0xf]
  %v1189 = vld [vmem:[%s3 + $0x58] sm:$0xf]
  %v1190 = vld [vmem:[%s3 + $0x5c] sm:$0xf]
  %v1191 = vld [vmem:[%s3 + $0x60] sm:$0xf]
  %v1192 = vld [vmem:[%s3 + $0x64] sm:$0xf]
  %v1193 = vld [vmem:[%s3 + $0x68] sm:$0xf]
  %v1194 = vld [vmem:[%s3 + $0x6c] sm:$0xf]
  %v1195 = vld [vmem:[%s3 + $0x70] sm:$0xf]
  %v1196 = vld [vmem:[%s3 + $0x74] sm:$0xf]
  %v1197 = vld [vmem:[%s3 + $0x78] sm:$0xf]
  %v1198 = vld [vmem:[%s3 + $0x7c] sm:$0xf]
  %v1199 = vld [vmem:[%s3 + $0x80] sm:$0xf]
  %v1200 = vld [vmem:[%s3 + $0x84] sm:$0xf]
  %v1201 = vld [vmem:[%s3 + $0x88] sm:$0xf]
  %v1202 = vld [vmem:[%s3 + $0x8c] sm:$0xf]
  %v1203 = vld [vmem:[%s3 + $0x90] sm:$0xf]
  %v1204 = vld [vmem:[%s3 + $0x94] sm:$0xf]
  %v1205 = vld [vmem:[%s3 + $0x98] sm:$0xf]
  %v1206 = vld [vmem:[%s3 + $0x9c] sm:$0xf]
  %v1207 = vld [vmem:[%s3 + $0xa0] sm:$0xf]
  %v1208 = vld [vmem:[%s3 + $0xa4] sm:$0xf]
  %v1209 = vld [vmem:[%s3 + $0xa8] sm:$0xf]
  %v1210 = vld [vmem:[%s3 + $0xac] sm:$0xf]
  %v1211 = vld [vmem:[%s3 + $0xb0] sm:$0xf]
  %v1212 = vld [vmem:[%s3 + $0xb4] sm:$0xf]
  %v1213 = vld [vmem:[%s3 + $0xb8] sm:$0xf]
  %v1214 = vld [vmem:[%s3 + $0xbc] sm:$0xf]
  %v1215 = vld [vmem:[%s3 + $0xc0] sm:$0xf]
  %v1216 = vld [vmem:[%s3 + $0xc4] sm:$0xf]
  %v1217 = vld [vmem:[%s3 + $0xc8] sm:$0xf]
  %v1218 = vld [vmem:[%s3 + $0xcc] sm:$0xf]
  %v1219 = vld [vmem:[%s3 + $0xd0] sm:$0xf]
  %v1220 = vld [vmem:[%s3 + $0xd4] sm:$0xf]
  %v1221 = vld [vmem:[%s3 + $0xd8] sm:$0xf]
  %v1222 = vld [vmem:[%s3 + $0xdc] sm:$0xf]
  %v1223 = vld [vmem:[%s3 + $0xe0] sm:$0xf]
  %v1224 = vld [vmem:[%s3 + $0xe4] sm:$0xf]
  %v1225 = vld [vmem:[%s3 + $0xe8] sm:$0xf]
  %v1226 = vld [vmem:[%s3 + $0xec] sm:$0xf]
  %v1227 = vld [vmem:[%s3 + $0xf0] sm:$0xf]
  %v1228 = vld [vmem:[%s3 + $0xf4] sm:$0xf]
  %v1229 = vld [vmem:[%s3 + $0xf8] sm:$0xf]
  %v1230 = vld [vmem:[%s3 + $0xfc] sm:$0xf]
  %v1231 = vld [vmem:[%s3 + $0x100] sm:$0xf]
  %v1232 = vld [vmem:[%s3 + $0x104] sm:$0xf]
  %v1233 = vld [vmem:[%s3 + $0x108] sm:$0xf]
  %v1234 = vld [vmem:[%s3 + $0x10c] sm:$0xf]
  %v1235 = vld [vmem:[%s3 + $0x110] sm:$0xf]
  %v1236 = vld [vmem:[%s3 + $0x114] sm:$0xf]
  %v1237 = vld [vmem:[%s3 + $0x118] sm:$0xf]
  %v1238 = vld [vmem:[%s3 + $0x11c] sm:$0xf]
  %v1239 = vld [vmem:[%s3 + $0x120] sm:$0xf]
  %v1240 = vld [vmem:[%s3 + $0x124] sm:$0xf]
  %v1241 = vld [vmem:[%s3 + $0x128] sm:$0xf]
  %v1242 = vld [vmem:[%s3 + $0x12c] sm:$0xf]
  %v1243 = vld [vmem:[%s3 + $0x130] sm:$0xf]
  %v1244 = vld [vmem:[%s3 + $0x134] sm:$0xf]
  %v1245 = vld [vmem:[%s3 + $0x138] sm:$0xf]
  %v1246 = vld [vmem:[%s3 + $0x13c] sm:$0xf]
  %v1247 = vld [vmem:[%s3 + $0x140] sm:$0xf]
  %v1248 = vld [vmem:[%s3 + $0x144] sm:$0xf]
  %v1249 = vld [vmem:[%s3 + $0x148] sm:$0xf]
  %v1250 = vld [vmem:[%s3 + $0x14c] sm:$0xf]
  %v1251 = vld [vmem:[%s3 + $0x150] sm:$0xf]
  %v1252 = vld [vmem:[%s3 + $0x154] sm:$0xf]
  %v1253 = vld [vmem:[%s3 + $0x158] sm:$0xf]
  %v1254 = vld [vmem:[%s3 + $0x15c] sm:$0xf]
  %v1255 = vld [vmem:[%s3 + $0x160] sm:$0xf]
  %v1256 = vld [vmem:[%s3 + $0x164] sm:$0xf]
  %v1257 = vld [vmem:[%s3 + $0x168] sm:$0xf]
  %v1258 = vld [vmem:[%s3 + $0x16c] sm:$0xf]
  %v1259 = vld [vmem:[%s3 + $0x170] sm:$0xf]
  %v1260 = vld [vmem:[%s3 + $0x174] sm:$0xf]
  %v1261 = vld [vmem:[%s3 + $0x178] sm:$0xf]
  %v1262 = vld [vmem:[%s3 + $0x17c] sm:$0xf]
  %v1263 = vld [vmem:[%s3 + $0x180] sm:$0xf]
  %v1264 = vld [vmem:[%s3 + $0x184] sm:$0xf]
  %v1265 = vld [vmem:[%s3 + $0x188] sm:$0xf]
  %v1266 = vld [vmem:[%s3 + $0x18c] sm:$0xf]
  %v1267 = vld [vmem:[%s3 + $0x190] sm:$0xf]
  %v1268 = vld [vmem:[%s3 + $0x194] sm:$0xf]
  %v1269 = vld [vmem:[%s3 + $0x198] sm:$0xf]
  %v1270 = vld [vmem:[%s3 + $0x19c] sm:$0xf]
  %v1271 = vld [vmem:[%s3 + $0x1a0] sm:$0xf]
  %v1272 = vld [vmem:[%s3 + $0x1a4] sm:$0xf]
  %v1273 = vld [vmem:[%s3 + $0x1a8] sm:$0xf]
  %v1274 = vld [vmem:[%s3 + $0x1ac] sm:$0xf]
  %v1275 = vld [vmem:[%s3 + $0x1b0] sm:$0xf]
  %v1276 = vld [vmem:[%s3 + $0x1b4] sm:$0xf]
  %v1277 = vld [vmem:[%s3 + $0x1b8] sm:$0xf]
  %v1278 = vld [vmem:[%s3 + $0x1bc] sm:$0xf]
  %v1279 = vld [vmem:[%s3 + $0x1c0] sm:$0xf]
  %v1280 = vld [vmem:[%s3 + $0x1c4] sm:$0xf]
  %v1281 = vld [vmem:[%s3 + $0x1c8] sm:$0xf]
  %v1282 = vld [vmem:[%s3 + $0x1cc] sm:$0xf]
  %v1283 = vld [vmem:[%s3 + $0x1d0] sm:$0xf]
  %v1284 = vld [vmem:[%s3 + $0x1d4] sm:$0xf]
  %v1285 = vld [vmem:[%s3 + $0x1d8] sm:$0xf]
  %v1286 = vld [vmem:[%s3 + $0x1dc] sm:$0xf]
  %v1287 = vld [vmem:[%s3 + $0x1e0] sm:$0xf]
  %v1288 = vld [vmem:[%s3 + $0x1e4] sm:$0xf]
  %v1289 = vld [vmem:[%s3 + $0x1e8] sm:$0xf]
  %v1290 = vld [vmem:[%s3 + $0x1ec] sm:$0xf]
  %v1291 = vld [vmem:[%s3 + $0x1f0] sm:$0xf]
  %v1292 = vld [vmem:[%s3 + $0x1f4] sm:$0xf]
  %v1293 = vld [vmem:[%s3 + $0x1f8] sm:$0xf]
  %v1294 = vld [vmem:[%s3 + $0x1fc] sm:$0xf]
  %v1295 = vld [vmem:[%s4] sm:$0x1]
  %v1297 = vlaneseq
  %v1298 = vshrl.u32 %v1297, 7
  %v1299 = vsub.s32 0, %v1298
  %v1300 = vrot.slane %v1295, %v1299
  %v1430 = vunpack.c.l.b16 %v1167
  %v1431 = vunpack.c.l.b16 %v1168
  %v1432 = vunpack.c.l.b16 %v1169
  %v1433 = vunpack.c.l.b16 %v1170
  %v1434 = vunpack.c.l.b16 %v1171
  %v1435 = vunpack.c.l.b16 %v1172
  %v1436 = vunpack.c.l.b16 %v1173
  %v1437 = vunpack.c.l.b16 %v1174
  %v1438 = vunpack.c.l.b16 %v1175
  %v1439 = vunpack.c.l.b16 %v1176
  %v1440 = vunpack.c.l.b16 %v1177
  %v1441 = vunpack.c.l.b16 %v1178
  %v1442 = vunpack.c.l.b16 %v1179
  %v1443 = vunpack.c.l.b16 %v1180
  %v1444 = vunpack.c.l.b16 %v1181
  %v1445 = vunpack.c.l.b16 %v1182
  %v1446 = vunpack.c.l.b16 %v1183
  %v1447 = vunpack.c.l.b16 %v1184
  %v1448 = vunpack.c.l.b16 %v1185
  %v1449 = vunpack.c.l.b16 %v1186
  %v1450 = vunpack.c.l.b16 %v1187
  %v1451 = vunpack.c.l.b16 %v1188
  %v1452 = vunpack.c.l.b16 %v1189
  %v1453 = vunpack.c.l.b16 %v1190
  %v1454 = vunpack.c.l.b16 %v1191
  %v1455 = vunpack.c.l.b16 %v1192
  %v1456 = vunpack.c.l.b16 %v1193
  %v1457 = vunpack.c.l.b16 %v1194
  %v1458 = vunpack.c.l.b16 %v1195
  %v1459 = vunpack.c.l.b16 %v1196
  %v1460 = vunpack.c.l.b16 %v1197
  %v1461 = vunpack.c.l.b16 %v1198
  %v1462 = vunpack.c.l.b16 %v1199
  %v1463 = vunpack.c.l.b16 %v1200
  %v1464 = vunpack.c.l.b16 %v1201
  %v1465 = vunpack.c.l.b16 %v1202
  %v1466 = vunpack.c.l.b16 %v1203
  %v1467 = vunpack.c.l.b16 %v1204
  %v1468 = vunpack.c.l.b16 %v1205
  %v1469 = vunpack.c.l.b16 %v1206
  %v1470 = vunpack.c.l.b16 %v1207
  %v1471 = vunpack.c.l.b16 %v1208
  %v1472 = vunpack.c.l.b16 %v1209
  %v1473 = vunpack.c.l.b16 %v1210
  %v1474 = vunpack.c.l.b16 %v1211
  %v1475 = vunpack.c.l.b16 %v1212
  %v1476 = vunpack.c.l.b16 %v1213
  %v1477 = vunpack.c.l.b16 %v1214
  %v1478 = vunpack.c.l.b16 %v1215
  %v1479 = vunpack.c.l.b16 %v1216
  %v1480 = vunpack.c.l.b16 %v1217
  %v1481 = vunpack.c.l.b16 %v1218
  %v1482 = vunpack.c.l.b16 %v1219
  %v1483 = vunpack.c.l.b16 %v1220
  %v1484 = vunpack.c.l.b16 %v1221
  %v1485 = vunpack.c.l.b16 %v1222
  %v1486 = vunpack.c.l.b16 %v1223
  %v1487 = vunpack.c.l.b16 %v1224
  %v1488 = vunpack.c.l.b16 %v1225
  %v1489 = vunpack.c.l.b16 %v1226
  %v1490 = vunpack.c.l.b16 %v1227
  %v1491 = vunpack.c.l.b16 %v1228
  %v1492 = vunpack.c.l.b16 %v1229
  %v1493 = vunpack.c.l.b16 %v1230
  %v1494 = vunpack.c.l.b16 %v1231
  %v1495 = vunpack.c.l.b16 %v1232
  %v1496 = vunpack.c.l.b16 %v1233
  %v1497 = vunpack.c.l.b16 %v1234
  %v1498 = vunpack.c.l.b16 %v1235
  %v1499 = vunpack.c.l.b16 %v1236
  %v1500 = vunpack.c.l.b16 %v1237
  %v1501 = vunpack.c.l.b16 %v1238
  %v1502 = vunpack.c.l.b16 %v1239
  %v1503 = vunpack.c.l.b16 %v1240
  %v1504 = vunpack.c.l.b16 %v1241
  %v1505 = vunpack.c.l.b16 %v1242
  %v1506 = vunpack.c.l.b16 %v1243
  %v1507 = vunpack.c.l.b16 %v1244
  %v1508 = vunpack.c.l.b16 %v1245
  %v1509 = vunpack.c.l.b16 %v1246
  %v1510 = vunpack.c.l.b16 %v1247
  %v1511 = vunpack.c.l.b16 %v1248
  %v1512 = vunpack.c.l.b16 %v1249
  %v1513 = vunpack.c.l.b16 %v1250
  %v1514 = vunpack.c.l.b16 %v1251
  %v1515 = vunpack.c.l.b16 %v1252
  %v1516 = vunpack.c.l.b16 %v1253
  %v1517 = vunpack.c.l.b16 %v1254
  %v1518 = vunpack.c.l.b16 %v1255
  %v1519 = vunpack.c.l.b16 %v1256
  %v1520 = vunpack.c.l.b16 %v1257
  %v1521 = vunpack.c.l.b16 %v1258
  %v1522 = vunpack.c.l.b16 %v1259
  %v1523 = vunpack.c.l.b16 %v1260
  %v1524 = vunpack.c.l.b16 %v1261
  %v1525 = vunpack.c.l.b16 %v1262
  %v1526 = vunpack.c.l.b16 %v1263
  %v1527 = vunpack.c.l.b16 %v1264
  %v1528 = vunpack.c.l.b16 %v1265
  %v1529 = vunpack.c.l.b16 %v1266
  %v1530 = vunpack.c.l.b16 %v1267
  %v1531 = vunpack.c.l.b16 %v1268
  %v1532 = vunpack.c.l.b16 %v1269
  %v1533 = vunpack.c.l.b16 %v1270
  %v1534 = vunpack.c.l.b16 %v1271
  %v1535 = vunpack.c.l.b16 %v1272
  %v1536 = vunpack.c.l.b16 %v1273
  %v1537 = vunpack.c.l.b16 %v1274
  %v1538 = vunpack.c.l.b16 %v1275
  %v1539 = vunpack.c.l.b16 %v1276
  %v1540 = vunpack.c.l.b16 %v1277
  %v1541 = vunpack.c.l.b16 %v1278
  %v1542 = vunpack.c.l.b16 %v1279
  %v1543 = vunpack.c.l.b16 %v1280
  %v1544 = vunpack.c.l.b16 %v1281
  %v1545 = vunpack.c.l.b16 %v1282
  %v1546 = vunpack.c.l.b16 %v1283
  %v1547 = vunpack.c.l.b16 %v1284
  %v1548 = vunpack.c.l.b16 %v1285
  %v1549 = vunpack.c.l.b16 %v1286
  %v1550 = vunpack.c.l.b16 %v1287
  %v1551 = vunpack.c.l.b16 %v1288
  %v1552 = vunpack.c.l.b16 %v1289
  %v1553 = vunpack.c.l.b16 %v1290
  %v1554 = vunpack.c.l.b16 %v1291
  %v1555 = vunpack.c.l.b16 %v1292
  %v1556 = vunpack.c.l.b16 %v1293
  %v1557 = vunpack.c.l.b16 %v1294
  %v1558 = vpack.c.b16 %v1431, %v1430
  %v1559 = vpack.c.b16 %v1433, %v1432
  %v1560 = vpack.c.b16 %v1435, %v1434
  %v1561 = vpack.c.b16 %v1437, %v1436
  %v1562 = vpack.c.b16 %v1439, %v1438
  %v1563 = vpack.c.b16 %v1441, %v1440
  %v1564 = vpack.c.b16 %v1443, %v1442
  %v1565 = vpack.c.b16 %v1445, %v1444
  %v1566 = vpack.c.b16 %v1447, %v1446
  %v1567 = vpack.c.b16 %v1449, %v1448
  %v1568 = vpack.c.b16 %v1451, %v1450
  %v1569 = vpack.c.b16 %v1453, %v1452
  %v1570 = vpack.c.b16 %v1455, %v1454
  %v1571 = vpack.c.b16 %v1457, %v1456
  %v1572 = vpack.c.b16 %v1459, %v1458
  %v1573 = vpack.c.b16 %v1461, %v1460
  %v1574 = vpack.c.b16 %v1463, %v1462
  %v1575 = vpack.c.b16 %v1465, %v1464
  %v1576 = vpack.c.b16 %v1467, %v1466
  %v1577 = vpack.c.b16 %v1469, %v1468
  %v1578 = vpack.c.b16 %v1471, %v1470
  %v1579 = vpack.c.b16 %v1473, %v1472
  %v1580 = vpack.c.b16 %v1475, %v1474
  %v1581 = vpack.c.b16 %v1477, %v1476
  %v1582 = vpack.c.b16 %v1479, %v1478
  %v1583 = vpack.c.b16 %v1481, %v1480
  %v1584 = vpack.c.b16 %v1483, %v1482
  %v1585 = vpack.c.b16 %v1485, %v1484
  %v1586 = vpack.c.b16 %v1487, %v1486
  %v1587 = vpack.c.b16 %v1489, %v1488
  %v1588 = vpack.c.b16 %v1491, %v1490
  %v1589 = vpack.c.b16 %v1493, %v1492
  %v1590 = vpack.c.b16 %v1495, %v1494
  %v1591 = vpack.c.b16 %v1497, %v1496
  %v1592 = vpack.c.b16 %v1499, %v1498
  %v1593 = vpack.c.b16 %v1501, %v1500
  %v1594 = vpack.c.b16 %v1503, %v1502
  %v1595 = vpack.c.b16 %v1505, %v1504
  %v1596 = vpack.c.b16 %v1507, %v1506
  %v1597 = vpack.c.b16 %v1509, %v1508
  %v1598 = vpack.c.b16 %v1511, %v1510
  %v1599 = vpack.c.b16 %v1513, %v1512
  %v1600 = vpack.c.b16 %v1515, %v1514
  %v1601 = vpack.c.b16 %v1517, %v1516
  %v1602 = vpack.c.b16 %v1519, %v1518
  %v1603 = vpack.c.b16 %v1521, %v1520
  %v1604 = vpack.c.b16 %v1523, %v1522
  %v1605 = vpack.c.b16 %v1525, %v1524
  %v1606 = vpack.c.b16 %v1527, %v1526
  %v1607 = vpack.c.b16 %v1529, %v1528
  %v1608 = vpack.c.b16 %v1531, %v1530
  %v1609 = vpack.c.b16 %v1533, %v1532
  %v1610 = vpack.c.b16 %v1535, %v1534
  %v1611 = vpack.c.b16 %v1537, %v1536
  %v1612 = vpack.c.b16 %v1539, %v1538
  %v1613 = vpack.c.b16 %v1541, %v1540
  %v1614 = vpack.c.b16 %v1543, %v1542
  %v1615 = vpack.c.b16 %v1545, %v1544
  %v1616 = vpack.c.b16 %v1547, %v1546
  %v1617 = vpack.c.b16 %v1549, %v1548
  %v1618 = vpack.c.b16 %v1551, %v1550
  %v1619 = vpack.c.b16 %v1553, %v1552
  %v1620 = vpack.c.b16 %v1555, %v1554
  %v1621 = vpack.c.b16 %v1557, %v1556
  %1686 = vmatprep.subr.bf16.mxu0 0
  %1687 = vmatpush1.bf16.msra.mxu0 %v1558
  %1688 = vmatprep.subr.bf16.mxu0 0
  %1689 = vmatpush1.bf16.msra.mxu0 %v1559
  %1690 = vmatprep.subr.bf16.mxu0 0
  %1691 = vmatpush1.bf16.msra.mxu0 %v1560
  %1692 = vmatprep.subr.bf16.mxu0 0
  %1693 = vmatpush1.bf16.msra.mxu0 %v1561
  %1694 = vmatprep.subr.bf16.mxu0 0
  %1695 = vmatpush1.bf16.msra.mxu0 %v1562
  %1696 = vmatprep.subr.bf16.mxu0 0
  %1697 = vmatpush1.bf16.msra.mxu0 %v1563
  %1698 = vmatprep.subr.bf16.mxu0 0
  %1699 = vmatpush1.bf16.msra.mxu0 %v1564
  %1700 = vmatprep.subr.bf16.mxu0 0
  %1701 = vmatpush1.bf16.msra.mxu0 %v1565
  %1702 = vmatprep.subr.bf16.mxu0 0
  %1703 = vmatpush1.bf16.msra.mxu0 %v1566
  %1704 = vmatprep.subr.bf16.mxu0 0
  %1705 = vmatpush1.bf16.msra.mxu0 %v1567
  %1706 = vmatprep.subr.bf16.mxu0 0
  %1707 = vmatpush1.bf16.msra.mxu0 %v1568
  %1708 = vmatprep.subr.bf16.mxu0 0
  %1709 = vmatpush1.bf16.msra.mxu0 %v1569
  %1710 = vmatprep.subr.bf16.mxu0 0
  %1711 = vmatpush1.bf16.msra.mxu0 %v1570
  %1712 = vmatprep.subr.bf16.mxu0 0
  %1713 = vmatpush1.bf16.msra.mxu0 %v1571
  %1714 = vmatprep.subr.bf16.mxu0 0
  %1715 = vmatpush1.bf16.msra.mxu0 %v1572
  %1716 = vmatprep.subr.bf16.mxu0 0
  %1717 = vmatpush1.bf16.msra.mxu0 %v1573
  %1718 = vmatprep.mubr.bf16.mxu0 %v1104
  %1719 = vmatmul.mubr.bf16.gmra.mrb[0].mxu0 %v1103
  %v1720 = vpop.f32.mrb[0].mxu0
  %v1721 = vadd.f32 %v1300, %v1720
  %v1722 = vpop.f32.mrb[0].mxu0
  %v1723 = vpop.f32.mrb[0].mxu0
  %v1724 = vadd.f32 %v1300, %v1723
  %v1725 = vpop.f32.mrb[0].mxu0
  %1726 = vmatprep.mubr.bf16.mxu0 %v1112
  %1727 = vmatmul.mubr.bf16.gmra.mrb[0].mxu0 %v1111
  %v1728 = vpop.f32.mrb[0].mxu0
  %v1729 = vadd.f32 %v1300, %v1728
  %v1730 = vpop.f32.mrb[0].mxu0
  %v1731 = vpop.f32.mrb[0].mxu0
  %v1732 = vadd.f32 %v1300, %v1731
  %v1733 = vpop.f32.mrb[0].mxu0
  %1734 = vmatprep.mubr.bf16.mxu0 %v1120
  %1735 = vmatmul.mubr.bf16.gmra.mrb[0].mxu0 %v1119
  %v1736 = vpop.f32.mrb[0].mxu0
  %v1737 = vadd.f32 %v1300, %v1736
  %v1738 = vpop.f32.mrb[0].mxu0
  %v1739 = vpop.f32.mrb[0].mxu0
  %v1740 = vadd.f32 %v1300, %v1739
  %v1741 = vpop.f32.mrb[0].mxu0
  %1742 = vmatprep.mubr.bf16.mxu0 %v1128
  %1743 = vmatmul.mubr.bf16.gmra.mrb[0].mxu0 %v1127
  %v1744 = vpop.f32.mrb[0].mxu0
  %v1745 = vadd.f32 %v1300, %v1744
  %v1746 = vpop.f32.mrb[0].mxu0
  %v1747 = vpop.f32.mrb[0].mxu0
  %v1748 = vadd.f32 %v1300, %v1747
  %v1749 = vpop.f32.mrb[0].mxu0
  %1750 = vmatprep.mubr.bf16.mxu0 %v1136
  %1751 = vmatmul.mubr.bf16.gmra.mrb[0].mxu0 %v1135
  %v1752 = vpop.f32.mrb[0].mxu0
  %v1753 = vadd.f32 %v1300, %v1752
  %v1754 = vpop.f32.mrb[0].mxu0
  %v1755 = vpop.f32.mrb[0].mxu0
  %v1756 = vadd.f32 %v1300, %v1755
  %v1757 = vpop.f32.mrb[0].mxu0
  %1758 = vmatprep.mubr.bf16.mxu0 %v1144
  %1759 = vmatmul.mubr.bf16.gmra.mrb[0].mxu0 %v1143
  %v1760 = vpop.f32.mrb[0].mxu0
  %v1761 = vadd.f32 %v1300, %v1760
  %v1762 = vpop.f32.mrb[0].mxu0
  %v1763 = vpop.f32.mrb[0].mxu0
  %v1764 = vadd.f32 %v1300, %v1763
  %v1765 = vpop.f32.mrb[0].mxu0
  %1766 = vmatprep.mubr.bf16.mxu0 %v1152
  %1767 = vmatmul.mubr.bf16.gmra.mrb[0].mxu0 %v1151
  %v1768 = vpop.f32.mrb[0].mxu0
  %v1769 = vadd.f32 %v1300, %v1768
  %v1770 = vpop.f32.mrb[0].mxu0
  %v1771 = vpop.f32.mrb[0].mxu0
  %v1772 = vadd.f32 %v1300, %v1771
  %v1773 = vpop.f32.mrb[0].mxu0
  %1774 = vmatprep.mubr.bf16.mxu0 %v1160
  %1775 = vmatmul.mubr.bf16.gmra.mrb[0].mxu0 %v1159
  %v1776 = vpop.f32.mrb[0].mxu0
  %v1777 = vadd.f32 %v1300, %v1776
  %v1778 = vpop.f32.mrb[0].mxu0
  %v1779 = vpop.f32.mrb[0].mxu0
  %v1780 = vadd.f32 %v1300, %v1779
  %v1781 = vpop.f32.mrb[0].mxu0
  %1782 = vdwg.mxu0
  %1783 = vmatprep.subr.bf16.mxu0 0
  %1784 = vmatpush1.bf16.msra.mxu0 %v1574
  %1785 = vmatprep.subr.bf16.mxu0 0
  %1786 = vmatpush1.bf16.msra.mxu0 %v1575
  %1787 = vmatprep.subr.bf16.mxu0 0
  %1788 = vmatpush1.bf16.msra.mxu0 %v1576
  %1789 = vmatprep.subr.bf16.mxu0 0
  %1790 = vmatpush1.bf16.msra.mxu0 %v1577
  %1791 = vmatprep.subr.bf16.mxu0 0
  %1792 = vmatpush1.bf16.msra.mxu0 %v1578
  %1793 = vmatprep.subr.bf16.mxu0 0
  %1794 = vmatpush1.bf16.msra.mxu0 %v1579
  %1795 = vmatprep.subr.bf16.mxu0 0
  %1796 = vmatpush1.bf16.msra.mxu0 %v1580
  %1797 = vmatprep.subr.bf16.mxu0 0
  %1798 = vmatpush1.bf16.msra.mxu0 %v1581
  %1799 = vmatprep.subr.bf16.mxu0 0
  %1800 = vmatpush1.bf16.msra.mxu0 %v1582
  %1801 = vmatprep.subr.bf16.mxu0 0
  %1802 = vmatpush1.bf16.msra.mxu0 %v1583
  %1803 = vmatprep.subr.bf16.mxu0 0
  %1804 = vmatpush1.bf16.msra.mxu0 %v1584
  %1805 = vmatprep.subr.bf16.mxu0 0
  %1806 = vmatpush1.bf16.msra.mxu0 %v1585
  %1807 = vmatprep.subr.bf16.mxu0 0
  %1808 = vmatpush1.bf16.msra.mxu0 %v1586
  %1809 = vmatprep.subr.bf16.mxu0 0
  %1810 = vmatpush1.bf16.msra.mxu0 %v1587
  %1811 = vmatprep.subr.bf16.mxu0 0
  %1812 = vmatpush1.bf16.msra.mxu0 %v1588
  %1813 = vmatprep.subr.bf16.mxu0 0
  %1814 = vmatpush1.bf16.msra.mxu0 %v1589
  %1815 = vmatprep.mubr.bf16.mxu0 %v1106
  %1816 = vmatmul.mubr.bf16.gmra.mrb[0].mxu0 %v1105
  %v1817 = vpop.f32.mrb[0].mxu0
  %v1818 = vadd.f32 %v1721, %v1817
  %v1819 = vpop.f32.mrb[0].mxu0
  %v1820 = vpop.f32.mrb[0].mxu0
  %v1821 = vadd.f32 %v1724, %v1820
  %v1822 = vpop.f32.mrb[0].mxu0
  %1823 = vmatprep.mubr.bf16.mxu0 %v1114
  %1824 = vmatmul.mubr.bf16.gmra.mrb[0].mxu0 %v1113
  %v1825 = vpop.f32.mrb[0].mxu0
  %v1826 = vadd.f32 %v1729, %v1825
  %v1827 = vpop.f32.mrb[0].mxu0
  %v1828 = vpop.f32.mrb[0].mxu0
  %v1829 = vadd.f32 %v1732, %v1828
  %v1830 = vpop.f32.mrb[0].mxu0
  %1831 = vmatprep.mubr.bf16.mxu0 %v1122
  %1832 = vmatmul.mubr.bf16.gmra.mrb[0].mxu0 %v1121
  %v1833 = vpop.f32.mrb[0].mxu0
  %v1834 = vadd.f32 %v1737, %v1833
  %v1835 = vpop.f32.mrb[0].mxu0
  %v1836 = vpop.f32.mrb[0].mxu0
  %v1837 = vadd.f32 %v1740, %v1836
  %v1838 = vpop.f32.mrb[0].mxu0
  %1839 = vmatprep.mubr.bf16.mxu0 %v1130
  %1840 = vmatmul.mubr.bf16.gmra.mrb[0].mxu0 %v1129
  %v1841 = vpop.f32.mrb[0].mxu0
  %v1842 = vadd.f32 %v1745, %v1841
  %v1843 = vpop.f32.mrb[0].mxu0
  %v1844 = vpop.f32.mrb[0].mxu0
  %v1845 = vadd.f32 %v1748, %v1844
  %v1846 = vpop.f32.mrb[0].mxu0
  %1847 = vmatprep.mubr.bf16.mxu0 %v1138
  %1848 = vmatmul.mubr.bf16.gmra.mrb[0].mxu0 %v1137
  %v1849 = vpop.f32.mrb[0].mxu0
  %v1850 = vadd.f32 %v1753, %v1849
  %v1851 = vpop.f32.mrb[0].mxu0
  %v1852 = vpop.f32.mrb[0].mxu0
  %v1853 = vadd.f32 %v1756, %v1852
  %v1854 = vpop.f32.mrb[0].mxu0
  %1855 = vmatprep.mubr.bf16.mxu0 %v1146
  %1856 = vmatmul.mubr.bf16.gmra.mrb[0].mxu0 %v1145
  %v1857 = vpop.f32.mrb[0].mxu0
  %v1858 = vadd.f32 %v1761, %v1857
  %v1859 = vpop.f32.mrb[0].mxu0
  %v1860 = vpop.f32.mrb[0].mxu0
  %v1861 = vadd.f32 %v1764, %v1860
  %v1862 = vpop.f32.mrb[0].mxu0
  %1863 = vmatprep.mubr.bf16.mxu0 %v1154
  %1864 = vmatmul.mubr.bf16.gmra.mrb[0].mxu0 %v1153
  %v1865 = vpop.f32.mrb[0].mxu0
  %v1866 = vadd.f32 %v1769, %v1865
  %v1867 = vpop.f32.mrb[0].mxu0
  %v1868 = vpop.f32.mrb[0].mxu0
  %v1869 = vadd.f32 %v1772, %v1868
  %v1870 = vpop.f32.mrb[0].mxu0
  %1871 = vmatprep.mubr.bf16.mxu0 %v1162
  %1872 = vmatmul.mubr.bf16.gmra.mrb[0].mxu0 %v1161
  %v1873 = vpop.f32.mrb[0].mxu0
  %v1874 = vadd.f32 %v1777, %v1873
  %v1875 = vpop.f32.mrb[0].mxu0
  %v1876 = vpop.f32.mrb[0].mxu0
  %v1877 = vadd.f32 %v1780, %v1876
  %v1878 = vpop.f32.mrb[0].mxu0
  %1879 = vdwg.mxu0
  %1880 = vmatprep.subr.bf16.mxu0 0
  %1881 = vmatpush1.bf16.msra.mxu0 %v1590
  %1882 = vmatprep.subr.bf16.mxu0 0
  %1883 = vmatpush1.bf16.msra.mxu0 %v1591
  %1884 = vmatprep.subr.bf16.mxu0 0
  %1885 = vmatpush1.bf16.msra.mxu0 %v1592
  %1886 = vmatprep.subr.bf16.mxu0 0
  %1887 = vmatpush1.bf16.msra.mxu0 %v1593
  %1888 = vmatprep.subr.bf16.mxu0 0
  %1889 = vmatpush1.bf16.msra.mxu0 %v1594
  %1890 = vmatprep.subr.bf16.mxu0 0
  %1891 = vmatpush1.bf16.msra.mxu0 %v1595
  %1892 = vmatprep.subr.bf16.mxu0 0
  %1893 = vmatpush1.bf16.msra.mxu0 %v1596
  %1894 = vmatprep.subr.bf16.mxu0 0
  %1895 = vmatpush1.bf16.msra.mxu0 %v1597
  %1896 = vmatprep.subr.bf16.mxu0 0
  %1897 = vmatpush1.bf16.msra.mxu0 %v1598
  %1898 = vmatprep.subr.bf16.mxu0 0
  %1899 = vmatpush1.bf16.msra.mxu0 %v1599
  %1900 = vmatprep.subr.bf16.mxu0 0
  %1901 = vmatpush1.bf16.msra.mxu0 %v1600
  %1902 = vmatprep.subr.bf16.mxu0 0
  %1903 = vmatpush1.bf16.msra.mxu0 %v1601
  %1904 = vmatprep.subr.bf16.mxu0 0
  %1905 = vmatpush1.bf16.msra.mxu0 %v1602
  %1906 = vmatprep.subr.bf16.mxu0 0
  %1907 = vmatpush1.bf16.msra.mxu0 %v1603
  %1908 = vmatprep.subr.bf16.mxu0 0
  %1909 = vmatpush1.bf16.msra.mxu0 %v1604
  %1910 = vmatprep.subr.bf16.mxu0 0
  %1911 = vmatpush1.bf16.msra.mxu0 %v1605
  %1912 = vmatprep.mubr.bf16.mxu0 %v1108
  %1913 = vmatmul.mubr.bf16.gmra.mrb[0].mxu0 %v1107
  %v1914 = vpop.f32.mrb[0].mxu0
  %v1915 = vadd.f32 %v1818, %v1914
  %v1916 = vpop.f32.mrb[0].mxu0
  %v1917 = vpop.f32.mrb[0].mxu0
  %v1918 = vadd.f32 %v1821, %v1917
  %v1919 = vpop.f32.mrb[0].mxu0
  %1920 = vmatprep.mubr.bf16.mxu0 %v1116
  %1921 = vmatmul.mubr.bf16.gmra.mrb[0].mxu0 %v1115
  %v1922 = vpop.f32.mrb[0].mxu0
  %v1923 = vadd.f32 %v1826, %v1922
  %v1924 = vpop.f32.mrb[0].mxu0
  %v1925 = vpop.f32.mrb[0].mxu0
  %v1926 = vadd.f32 %v1829, %v1925
  %v1927 = vpop.f32.mrb[0].mxu0
  %1928 = vmatprep.mubr.bf16.mxu0 %v1124
  %1929 = vmatmul.mubr.bf16.gmra.mrb[0].mxu0 %v1123
  %v1930 = vpop.f32.mrb[0].mxu0
  %v1931 = vadd.f32 %v1834, %v1930
  %v1932 = vpop.f32.mrb[0].mxu0
  %v1933 = vpop.f32.mrb[0].mxu0
  %v1934 = vadd.f32 %v1837, %v1933
  %v1935 = vpop.f32.mrb[0].mxu0
  %1936 = vmatprep.mubr.bf16.mxu0 %v1132
  %1937 = vmatmul.mubr.bf16.gmra.mrb[0].mxu0 %v1131
  %v1938 = vpop.f32.mrb[0].mxu0
  %v1939 = vadd.f32 %v1842, %v1938
  %v1940 = vpop.f32.mrb[0].mxu0
  %v1941 = vpop.f32.mrb[0].mxu0
  %v1942 = vadd.f32 %v1845, %v1941
  %v1943 = vpop.f32.mrb[0].mxu0
  %1944 = vmatprep.mubr.bf16.mxu0 %v1140
  %1945 = vmatmul.mubr.bf16.gmra.mrb[0].mxu0 %v1139
  %v1946 = vpop.f32.mrb[0].mxu0
  %v1947 = vadd.f32 %v1850, %v1946
  %v1948 = vpop.f32.mrb[0].mxu0
  %v1949 = vpop.f32.mrb[0].mxu0
  %v1950 = vadd.f32 %v1853, %v1949
  %v1951 = vpop.f32.mrb[0].mxu0
  %1952 = vmatprep.mubr.bf16.mxu0 %v1148
  %1953 = vmatmul.mubr.bf16.gmra.mrb[0].mxu0 %v1147
  %v1954 = vpop.f32.mrb[0].mxu0
  %v1955 = vadd.f32 %v1858, %v1954
  %v1956 = vpop.f32.mrb[0].mxu0
  %v1957 = vpop.f32.mrb[0].mxu0
  %v1958 = vadd.f32 %v1861, %v1957
  %v1959 = vpop.f32.mrb[0].mxu0
  %1960 = vmatprep.mubr.bf16.mxu0 %v1156
  %1961 = vmatmul.mubr.bf16.gmra.mrb[0].mxu0 %v1155
  %v1962 = vpop.f32.mrb[0].mxu0
  %v1963 = vadd.f32 %v1866, %v1962
  %v1964 = vpop.f32.mrb[0].mxu0
  %v1965 = vpop.f32.mrb[0].mxu0
  %v1966 = vadd.f32 %v1869, %v1965
  %v1967 = vpop.f32.mrb[0].mxu0
  %1968 = vmatprep.mubr.bf16.mxu0 %v1164
  %1969 = vmatmul.mubr.bf16.gmra.mrb[0].mxu0 %v1163
  %v1970 = vpop.f32.mrb[0].mxu0
  %v1971 = vadd.f32 %v1874, %v1970
  %v1972 = vpop.f32.mrb[0].mxu0
  %v1973 = vpop.f32.mrb[0].mxu0
  %v1974 = vadd.f32 %v1877, %v1973
  %v1975 = vpop.f32.mrb[0].mxu0
  %1976 = vdwg.mxu0
  %1977 = vmatprep.subr.bf16.mxu0 0
  %1978 = vmatpush1.bf16.msra.mxu0 %v1606
  %1979 = vmatprep.subr.bf16.mxu0 0
  %1980 = vmatpush1.bf16.msra.mxu0 %v1607
  %1981 = vmatprep.subr.bf16.mxu0 0
  %1982 = vmatpush1.bf16.msra.mxu0 %v1608
  %1983 = vmatprep.subr.bf16.mxu0 0
  %1984 = vmatpush1.bf16.msra.mxu0 %v1609
  %1985 = vmatprep.subr.bf16.mxu0 0
  %1986 = vmatpush1.bf16.msra.mxu0 %v1610
  %1987 = vmatprep.subr.bf16.mxu0 0
  %1988 = vmatpush1.bf16.msra.mxu0 %v1611
  %1989 = vmatprep.subr.bf16.mxu0 0
  %1990 = vmatpush1.bf16.msra.mxu0 %v1612
  %1991 = vmatprep.subr.bf16.mxu0 0
  %1992 = vmatpush1.bf16.msra.mxu0 %v1613
  %1993 = vmatprep.subr.bf16.mxu0 0
  %1994 = vmatpush1.bf16.msra.mxu0 %v1614
  %1995 = vmatprep.subr.bf16.mxu0 0
  %1996 = vmatpush1.bf16.msra.mxu0 %v1615
  %1997 = vmatprep.subr.bf16.mxu0 0
  %1998 = vmatpush1.bf16.msra.mxu0 %v1616
  %1999 = vmatprep.subr.bf16.mxu0 0
  %2000 = vmatpush1.bf16.msra.mxu0 %v1617
  %2001 = vmatprep.subr.bf16.mxu0 0
  %2002 = vmatpush1.bf16.msra.mxu0 %v1618
  %2003 = vmatprep.subr.bf16.mxu0 0
  %2004 = vmatpush1.bf16.msra.mxu0 %v1619
  %2005 = vmatprep.subr.bf16.mxu0 0
  %2006 = vmatpush1.bf16.msra.mxu0 %v1620
  %2007 = vmatprep.subr.bf16.mxu0 0
  %2008 = vmatpush1.bf16.msra.mxu0 %v1621
  %2009 = vmatprep.mubr.bf16.mxu0 %v1110
  %2010 = vmatmul.mubr.bf16.gmra.mrb[0].mxu0 %v1109
  %v2011 = vpop.f32.mrb[0].mxu0
  %v2012 = vadd.f32 %v1915, %v2011
  %v2013 = vpop.f32.mrb[0].mxu0
  %v2014 = vpop.f32.mrb[0].mxu0
  %v2015 = vadd.f32 %v1918, %v2014
  %v2016 = vpop.f32.mrb[0].mxu0
  %2017 = vmatprep.mubr.bf16.mxu0 %v1118
  %2018 = vmatmul.mubr.bf16.gmra.mrb[0].mxu0 %v1117
  %v2019 = vpop.f32.mrb[0].mxu0
  %v2020 = vadd.f32 %v1923, %v2019
  %v2021 = vpop.f32.mrb[0].mxu0
  %v2022 = vpop.f32.mrb[0].mxu0
  %v2023 = vadd.f32 %v1926, %v2022
  %v2024 = vpop.f32.mrb[0].mxu0
  %2025 = vmatprep.mubr.bf16.mxu0 %v1126
  %2026 = vmatmul.mubr.bf16.gmra.mrb[0].mxu0 %v1125
  %v2027 = vpop.f32.mrb[0].mxu0
  %v2028 = vadd.f32 %v1931, %v2027
  %v2029 = vpop.f32.mrb[0].mxu0
  %v2030 = vpop.f32.mrb[0].mxu0
  %v2031 = vadd.f32 %v1934, %v2030
  %v2032 = vpop.f32.mrb[0].mxu0
  %2033 = vmatprep.mubr.bf16.mxu0 %v1134
  %2034 = vmatmul.mubr.bf16.gmra.mrb[0].mxu0 %v1133
  %v2035 = vpop.f32.mrb[0].mxu0
  %v2036 = vadd.f32 %v1939, %v2035
  %v2037 = vpop.f32.mrb[0].mxu0
  %v2038 = vpop.f32.mrb[0].mxu0
  %v2039 = vadd.f32 %v1942, %v2038
  %v2040 = vpop.f32.mrb[0].mxu0
  %2041 = vmatprep.mubr.bf16.mxu0 %v1142
  %2042 = vmatmul.mubr.bf16.gmra.mrb[0].mxu0 %v1141
  %v2043 = vpop.f32.mrb[0].mxu0
  %v2044 = vadd.f32 %v1947, %v2043
  %v2045 = vpop.f32.mrb[0].mxu0
  %v2046 = vpop.f32.mrb[0].mxu0
  %v2047 = vadd.f32 %v1950, %v2046
  %v2048 = vpop.f32.mrb[0].mxu0
  %2049 = vmatprep.mubr.bf16.mxu0 %v1150
  %2050 = vmatmul.mubr.bf16.gmra.mrb[0].mxu0 %v1149
  %v2051 = vpop.f32.mrb[0].mxu0
  %v2052 = vadd.f32 %v1955, %v2051
  %v2053 = vpop.f32.mrb[0].mxu0
  %v2054 = vpop.f32.mrb[0].mxu0
  %v2055 = vadd.f32 %v1958, %v2054
  %v2056 = vpop.f32.mrb[0].mxu0
  %2057 = vmatprep.mubr.bf16.mxu0 %v1158
  %2058 = vmatmul.mubr.bf16.gmra.mrb[0].mxu0 %v1157
  %v2059 = vpop.f32.mrb[0].mxu0
  %v2060 = vadd.f32 %v1963, %v2059
  %v2061 = vpop.f32.mrb[0].mxu0
  %v2062 = vpop.f32.mrb[0].mxu0
  %v2063 = vadd.f32 %v1966, %v2062
  %v2064 = vpop.f32.mrb[0].mxu0
  %2065 = vmatprep.mubr.bf16.mxu0 %v1166
  %2066 = vmatmul.mubr.bf16.gmra.mrb[0].mxu0 %v1165
  %v2067 = vpop.f32.mrb[0].mxu0
  %v2068 = vadd.f32 %v1971, %v2067
  %v2069 = vpop.f32.mrb[0].mxu0
  %v2070 = vpop.f32.mrb[0].mxu0
  %v2071 = vadd.f32 %v1974, %v2070
  %v2072 = vpop.f32.mrb[0].mxu0
  %2073 = vdwg.mxu0
  %v2074 = vmax.f32 %v2012, 0.0
  %v2075 = vmax.f32 %v2015, 0.0
  %v2076 = vmax.f32 %v2020, 0.0
  %v2077 = vmax.f32 %v2023, 0.0
  %v2078 = vmax.f32 %v2028, 0.0
  %v2079 = vmax.f32 %v2031, 0.0
  %v2080 = vmax.f32 %v2036, 0.0
  %v2081 = vmax.f32 %v2039, 0.0
  %v2082 = vmax.f32 %v2044, 0.0
  %v2083 = vmax.f32 %v2047, 0.0
  %v2084 = vmax.f32 %v2052, 0.0
  %v2085 = vmax.f32 %v2055, 0.0
  %v2086 = vmax.f32 %v2060, 0.0
  %v2087 = vmax.f32 %v2063, 0.0
  %v2088 = vmax.f32 %v2068, 0.0
  %v2089 = vmax.f32 %v2071, 0.0
  %v2090 = vpack.c.bf16 %v2075, %v2074
  %v2091 = vpack.c.bf16 %v2077, %v2076
  %v2092 = vpack.c.bf16 %v2079, %v2078
  %v2093 = vpack.c.bf16 %v2081, %v2080
  %v2094 = vpack.c.bf16 %v2083, %v2082
  %v2095 = vpack.c.bf16 %v2085, %v2084
  %v2096 = vpack.c.bf16 %v2087, %v2086
  %v2097 = vpack.c.bf16 %v2089, %v2088
  %v2098 = vld [vmem:[%s5] sm:$0xf]
  %v2099 = vld [vmem:[%s5 + $0x4] sm:$0xf]
  %v2100 = vld [vmem:[%s5 + $0x8] sm:$0xf]
  %v2101 = vld [vmem:[%s5 + $0xc] sm:$0xf]
  %v2102 = vld [vmem:[%s5 + $0x10] sm:$0xf]
  %v2103 = vld [vmem:[%s5 + $0x14] sm:$0xf]
  %v2104 = vld [vmem:[%s5 + $0x18] sm:$0xf]
  %v2105 = vld [vmem:[%s5 + $0x1c] sm:$0xf]
  %v2106 = vld [vmem:[%s5 + $0x20] sm:$0xf]
  %v2107 = vld [vmem:[%s5 + $0x24] sm:$0xf]
  %v2108 = vld [vmem:[%s5 + $0x28] sm:$0xf]
  %v2109 = vld [vmem:[%s5 + $0x2c] sm:$0xf]
  %v2110 = vld [vmem:[%s5 + $0x30] sm:$0xf]
  %v2111 = vld [vmem:[%s5 + $0x34] sm:$0xf]
  %v2112 = vld [vmem:[%s5 + $0x38] sm:$0xf]
  %v2113 = vld [vmem:[%s5 + $0x3c] sm:$0xf]
  %v2114 = vld [vmem:[%s6] sm:$0x1]
  %v2116 = vlaneseq
  %v2117 = vshrl.u32 %v2116, 7
  %v2118 = vsub.s32 0, %v2117
  %v2119 = vrot.slane %v2114, %v2118
  %v2137 = vunpack.c.l.b16 %v2098
  %v2138 = vunpack.c.l.b16 %v2099
  %v2139 = vunpack.c.l.b16 %v2100
  %v2140 = vunpack.c.l.b16 %v2101
  %v2141 = vunpack.c.l.b16 %v2102
  %v2142 = vunpack.c.l.b16 %v2103
  %v2143 = vunpack.c.l.b16 %v2104
  %v2144 = vunpack.c.l.b16 %v2105
  %v2145 = vunpack.c.l.b16 %v2106
  %v2146 = vunpack.c.l.b16 %v2107
  %v2147 = vunpack.c.l.b16 %v2108
  %v2148 = vunpack.c.l.b16 %v2109
  %v2149 = vunpack.c.l.b16 %v2110
  %v2150 = vunpack.c.l.b16 %v2111
  %v2151 = vunpack.c.l.b16 %v2112
  %v2152 = vunpack.c.l.b16 %v2113
  %v2153 = vpack.c.b16 %v2138, %v2137
  %v2154 = vpack.c.b16 %v2140, %v2139
  %v2155 = vpack.c.b16 %v2142, %v2141
  %v2156 = vpack.c.b16 %v2144, %v2143
  %v2157 = vpack.c.b16 %v2146, %v2145
  %v2158 = vpack.c.b16 %v2148, %v2147
  %v2159 = vpack.c.b16 %v2150, %v2149
  %v2160 = vpack.c.b16 %v2152, %v2151
  %2169 = vmatprep.subr.bf16.mxu0 0
  %2170 = vmatpush1.bf16.msra.mxu0 %v2153
  %2171 = vmatprep.subr.bf16.mxu0 0
  %2172 = vmatpush1.bf16.msra.mxu0 %v2154
  %2173 = vmatprep.subr.bf16.mxu0 0
  %2174 = vmatpush1.bf16.msra.mxu0 %v2155
  %2175 = vmatprep.subr.bf16.mxu0 0
  %2176 = vmatpush1.bf16.msra.mxu0 %v2156
  %2177 = vmatprep.subr.bf16.mxu0 0
  %2178 = vmatpush1.bf16.msra.mxu0 %v2157
  %2179 = vmatprep.subr.bf16.mxu0 0
  %2180 = vmatpush1.bf16.msra.mxu0 %v2158
  %2181 = vmatprep.subr.bf16.mxu0 0
  %2182 = vmatpush1.bf16.msra.mxu0 %v2159
  %2183 = vmatprep.subr.bf16.mxu0 0
  %2184 = vmatpush1.bf16.msra.mxu0 %v2160
  %2185 = vmatprep.subr.bf16.mxu0 0
  %2186 = vmatpush1.bf16.msra.mxu0 0
  %2187 = vmatprep.subr.bf16.mxu0 0
  %2188 = vmatpush1.bf16.msra.mxu0 0
  %2189 = vmatprep.subr.bf16.mxu0 0
  %2190 = vmatpush1.bf16.msra.mxu0 0
  %2191 = vmatprep.subr.bf16.mxu0 0
  %2192 = vmatpush1.bf16.msra.mxu0 0
  %2193 = vmatprep.subr.bf16.mxu0 0
  %2194 = vmatpush1.bf16.msra.mxu0 0
  %2195 = vmatprep.subr.bf16.mxu0 0
  %2196 = vmatpush1.bf16.msra.mxu0 0
  %2197 = vmatprep.subr.bf16.mxu0 0
  %2198 = vmatpush1.bf16.msra.mxu0 0
  %2199 = vmatprep.subr.bf16.mxu0 0
  %2200 = vmatpush1.bf16.msra.mxu0 0
  %2201 = vmatprep.mubr.bf16.mxu0 0
  %2202 = vmatmul.mubr.bf16.gmra.mrb[0].mxu0 %v2090
  %v2203 = vpop.f32.mrb[0].mxu0
  %v2204 = vadd.f32 %v2119, %v2203
  %v2205 = vpop.f32.mrb[0].mxu0
  %v2206 = vpop.f32.mrb[0].mxu0
  %v2207 = vadd.f32 %v2119, %v2206
  %v2208 = vpop.f32.mrb[0].mxu0
  %2209 = vmatprep.mubr.bf16.mxu0 0
  %2210 = vmatmul.mubr.bf16.gmra.mrb[0].mxu0 %v2091
  %v2211 = vpop.f32.mrb[0].mxu0
  %v2212 = vadd.f32 %v2119, %v2211
  %v2213 = vpop.f32.mrb[0].mxu0
  %v2214 = vpop.f32.mrb[0].mxu0
  %v2215 = vadd.f32 %v2119, %v2214
  %v2216 = vpop.f32.mrb[0].mxu0
  %2217 = vmatprep.mubr.bf16.mxu0 0
  %2218 = vmatmul.mubr.bf16.gmra.mrb[0].mxu0 %v2092
  %v2219 = vpop.f32.mrb[0].mxu0
  %v2220 = vadd.f32 %v2119, %v2219
  %v2221 = vpop.f32.mrb[0].mxu0
  %v2222 = vpop.f32.mrb[0].mxu0
  %v2223 = vadd.f32 %v2119, %v2222
  %v2224 = vpop.f32.mrb[0].mxu0
  %2225 = vmatprep.mubr.bf16.mxu0 0
  %2226 = vmatmul.mubr.bf16.gmra.mrb[0].mxu0 %v2093
  %v2227 = vpop.f32.mrb[0].mxu0
  %v2228 = vadd.f32 %v2119, %v2227
  %v2229 = vpop.f32.mrb[0].mxu0
  %v2230 = vpop.f32.mrb[0].mxu0
  %v2231 = vadd.f32 %v2119, %v2230
  %v2232 = vpop.f32.mrb[0].mxu0
  %2233 = vmatprep.mubr.bf16.mxu0 0
  %2234 = vmatmul.mubr.bf16.gmra.mrb[0].mxu0 %v2094
  %v2235 = vpop.f32.mrb[0].mxu0
  %v2236 = vadd.f32 %v2119, %v2235
  %v2237 = vpop.f32.mrb[0].mxu0
  %v2238 = vpop.f32.mrb[0].mxu0
  %v2239 = vadd.f32 %v2119, %v2238
  %v2240 = vpop.f32.mrb[0].mxu0
  %2241 = vmatprep.mubr.bf16.mxu0 0
  %2242 = vmatmul.mubr.bf16.gmra.mrb[0].mxu0 %v2095
  %v2243 = vpop.f32.mrb[0].mxu0
  %v2244 = vadd.f32 %v2119, %v2243
  %v2245 = vpop.f32.mrb[0].mxu0
  %v2246 = vpop.f32.mrb[0].mxu0
  %v2247 = vadd.f32 %v2119, %v2246
  %v2248 = vpop.f32.mrb[0].mxu0
  %2249 = vmatprep.mubr.bf16.mxu0 0
  %2250 = vmatmul.mubr.bf16.gmra.mrb[0].mxu0 %v2096
  %v2251 = vpop.f32.mrb[0].mxu0
  %v2252 = vadd.f32 %v2119, %v2251
  %v2253 = vpop.f32.mrb[0].mxu0
  %v2254 = vpop.f32.mrb[0].mxu0
  %v2255 = vadd.f32 %v2119, %v2254
  %v2256 = vpop.f32.mrb[0].mxu0
  %2257 = vmatprep.mubr.bf16.mxu0 0
  %2258 = vmatmul.mubr.bf16.gmra.mrb[0].mxu0 %v2097
  %v2259 = vpop.f32.mrb[0].mxu0
  %v2260 = vadd.f32 %v2119, %v2259
  %v2261 = vpop.f32.mrb[0].mxu0
  %v2262 = vpop.f32.mrb[0].mxu0
  %v2263 = vadd.f32 %v2119, %v2262
  %v2264 = vpop.f32.mrb[0].mxu0
  %2265 = vdwg.mxu0
  %v2266 = vmax.f32 %v2204, 0.0
  %v2267 = vmax.f32 %v2207, 0.0
  %v2268 = vmax.f32 %v2212, 0.0
  %v2269 = vmax.f32 %v2215, 0.0
  %v2270 = vmax.f32 %v2220, 0.0
  %v2271 = vmax.f32 %v2223, 0.0
  %v2272 = vmax.f32 %v2228, 0.0
  %v2273 = vmax.f32 %v2231, 0.0
  %v2274 = vmax.f32 %v2236, 0.0
  %v2275 = vmax.f32 %v2239, 0.0
  %v2276 = vmax.f32 %v2244, 0.0
  %v2277 = vmax.f32 %v2247, 0.0
  %v2278 = vmax.f32 %v2252, 0.0
  %v2279 = vmax.f32 %v2255, 0.0
  %v2280 = vmax.f32 %v2260, 0.0
  %v2281 = vmax.f32 %v2263, 0.0
  %v2282 = vpack.c.bf16 %v2267, %v2266
  %v2283 = vpack.c.bf16 %v2269, %v2268
  %v2284 = vpack.c.bf16 %v2271, %v2270
  %v2285 = vpack.c.bf16 %v2273, %v2272
  %v2286 = vpack.c.bf16 %v2275, %v2274
  %v2287 = vpack.c.bf16 %v2277, %v2276
  %v2288 = vpack.c.bf16 %v2279, %v2278
  %v2289 = vpack.c.bf16 %v2281, %v2280
  %v2290 = vld [vmem:[%s7] sm:$0xf]
  %v2291 = vld [vmem:[%s7 + $0x4] sm:$0xf]
  %v2292 = vld [vmem:[%s7 + $0x8] sm:$0xf]
  %v2293 = vld [vmem:[%s7 + $0xc] sm:$0xf]
  %v2294 = vld [vmem:[%s7 + $0x10] sm:$0xf]
  %v2295 = vld [vmem:[%s7 + $0x14] sm:$0xf]
  %v2296 = vld [vmem:[%s7 + $0x18] sm:$0xf]
  %v2297 = vld [vmem:[%s7 + $0x1c] sm:$0xf]
  %v2298 = vld [vmem:[%s7 + $0x20] sm:$0xf]
  %v2299 = vld [vmem:[%s7 + $0x24] sm:$0xf]
  %v2300 = vld [vmem:[%s7 + $0x28] sm:$0xf]
  %v2301 = vld [vmem:[%s7 + $0x2c] sm:$0xf]
  %v2302 = vld [vmem:[%s7 + $0x30] sm:$0xf]
  %v2303 = vld [vmem:[%s7 + $0x34] sm:$0xf]
  %v2304 = vld [vmem:[%s7 + $0x38] sm:$0xf]
  %v2305 = vld [vmem:[%s7 + $0x3c] sm:$0xf]
  %v2306 = vld [vmem:[%s8] sm:$0x1]
  %v2308 = vlaneseq
  %v2309 = vshrl.u32 %v2308, 7
  %v2310 = vsub.s32 0, %v2309
  %v2311 = vrot.slane %v2306, %v2310
  %v2329 = vunpack.c.l.b16 %v2290
  %v2330 = vunpack.c.l.b16 %v2291
  %v2331 = vunpack.c.l.b16 %v2292
  %v2332 = vunpack.c.l.b16 %v2293
  %v2333 = vunpack.c.l.b16 %v2294
  %v2334 = vunpack.c.l.b16 %v2295
  %v2335 = vunpack.c.l.b16 %v2296
  %v2336 = vunpack.c.l.b16 %v2297
  %v2337 = vunpack.c.l.b16 %v2298
  %v2338 = vunpack.c.l.b16 %v2299
  %v2339 = vunpack.c.l.b16 %v2300
  %v2340 = vunpack.c.l.b16 %v2301
  %v2341 = vunpack.c.l.b16 %v2302
  %v2342 = vunpack.c.l.b16 %v2303
  %v2343 = vunpack.c.l.b16 %v2304
  %v2344 = vunpack.c.l.b16 %v2305
  %v2345 = vpack.c.b16 %v2330, %v2329
  %v2346 = vpack.c.b16 %v2332, %v2331
  %v2347 = vpack.c.b16 %v2334, %v2333
  %v2348 = vpack.c.b16 %v2336, %v2335
  %v2349 = vpack.c.b16 %v2338, %v2337
  %v2350 = vpack.c.b16 %v2340, %v2339
  %v2351 = vpack.c.b16 %v2342, %v2341
  %v2352 = vpack.c.b16 %v2344, %v2343
  %2361 = vmatprep.subr.bf16.mxu0 0
  %2362 = vmatpush1.bf16.msra.mxu0 %v2345
  %2363 = vmatprep.subr.bf16.mxu0 0
  %2364 = vmatpush1.bf16.msra.mxu0 %v2346
  %2365 = vmatprep.subr.bf16.mxu0 0
  %2366 = vmatpush1.bf16.msra.mxu0 %v2347
  %2367 = vmatprep.subr.bf16.mxu0 0
  %2368 = vmatpush1.bf16.msra.mxu0 %v2348
  %2369 = vmatprep.subr.bf16.mxu0 0
  %2370 = vmatpush1.bf16.msra.mxu0 %v2349
  %2371 = vmatprep.subr.bf16.mxu0 0
  %2372 = vmatpush1.bf16.msra.mxu0 %v2350
  %2373 = vmatprep.subr.bf16.mxu0 0
  %2374 = vmatpush1.bf16.msra.mxu0 %v2351
  %2375 = vmatprep.subr.bf16.mxu0 0
  %2376 = vmatpush1.bf16.msra.mxu0 %v2352
  %2377 = vmatprep.subr.bf16.mxu0 0
  %2378 = vmatpush1.bf16.msra.mxu0 0
  %2379 = vmatprep.subr.bf16.mxu0 0
  %2380 = vmatpush1.bf16.msra.mxu0 0
  %2381 = vmatprep.subr.bf16.mxu0 0
  %2382 = vmatpush1.bf16.msra.mxu0 0
  %2383 = vmatprep.subr.bf16.mxu0 0
  %2384 = vmatpush1.bf16.msra.mxu0 0
  %2385 = vmatprep.subr.bf16.mxu0 0
  %2386 = vmatpush1.bf16.msra.mxu0 0
  %2387 = vmatprep.subr.bf16.mxu0 0
  %2388 = vmatpush1.bf16.msra.mxu0 0
  %2389 = vmatprep.subr.bf16.mxu0 0
  %2390 = vmatpush1.bf16.msra.mxu0 0
  %2391 = vmatprep.subr.bf16.mxu0 0
  %2392 = vmatpush1.bf16.msra.mxu0 0
  %2393 = vmatprep.mubr.bf16.mxu0 0
  %2394 = vmatmul.mubr.bf16.gmra.mrb[0].mxu0 %v2282
  %v2395 = vpop.f32.mrb[0].mxu0
  %v2396 = vadd.f32 %v2311, %v2395
  %v2397 = vpop.f32.mrb[0].mxu0
  %v2398 = vpop.f32.mrb[0].mxu0
  %v2399 = vadd.f32 %v2311, %v2398
  %v2400 = vpop.f32.mrb[0].mxu0
  %2401 = vmatprep.mubr.bf16.mxu0 0
  %2402 = vmatmul.mubr.bf16.gmra.mrb[0].mxu0 %v2283
  %v2403 = vpop.f32.mrb[0].mxu0
  %v2404 = vadd.f32 %v2311, %v2403
  %v2405 = vpop.f32.mrb[0].mxu0
  %v2406 = vpop.f32.mrb[0].mxu0
  %v2407 = vadd.f32 %v2311, %v2406
  %v2408 = vpop.f32.mrb[0].mxu0
  %2409 = vmatprep.mubr.bf16.mxu0 0
  %2410 = vmatmul.mubr.bf16.gmra.mrb[0].mxu0 %v2284
  %v2411 = vpop.f32.mrb[0].mxu0
  %v2412 = vadd.f32 %v2311, %v2411
  %v2413 = vpop.f32.mrb[0].mxu0
  %v2414 = vpop.f32.mrb[0].mxu0
  %v2415 = vadd.f32 %v2311, %v2414
  %v2416 = vpop.f32.mrb[0].mxu0
  %2417 = vmatprep.mubr.bf16.mxu0 0
  %2418 = vmatmul.mubr.bf16.gmra.mrb[0].mxu0 %v2285
  %v2419 = vpop.f32.mrb[0].mxu0
  %v2420 = vadd.f32 %v2311, %v2419
  %v2421 = vpop.f32.mrb[0].mxu0
  %v2422 = vpop.f32.mrb[0].mxu0
  %v2423 = vadd.f32 %v2311, %v2422
  %v2424 = vpop.f32.mrb[0].mxu0
  %2425 = vmatprep.mubr.bf16.mxu0 0
  %2426 = vmatmul.mubr.bf16.gmra.mrb[0].mxu0 %v2286
  %v2427 = vpop.f32.mrb[0].mxu0
  %v2428 = vadd.f32 %v2311, %v2427
  %v2429 = vpop.f32.mrb[0].mxu0
  %v2430 = vpop.f32.mrb[0].mxu0
  %v2431 = vadd.f32 %v2311, %v2430
  %v2432 = vpop.f32.mrb[0].mxu0
  %2433 = vmatprep.mubr.bf16.mxu0 0
  %2434 = vmatmul.mubr.bf16.gmra.mrb[0].mxu0 %v2287
  %v2435 = vpop.f32.mrb[0].mxu0
  %v2436 = vadd.f32 %v2311, %v2435
  %v2437 = vpop.f32.mrb[0].mxu0
  %v2438 = vpop.f32.mrb[0].mxu0
  %v2439 = vadd.f32 %v2311, %v2438
  %v2440 = vpop.f32.mrb[0].mxu0
  %2441 = vmatprep.mubr.bf16.mxu0 0
  %2442 = vmatmul.mubr.bf16.gmra.mrb[0].mxu0 %v2288
  %v2443 = vpop.f32.mrb[0].mxu0
  %v2444 = vadd.f32 %v2311, %v2443
  %v2445 = vpop.f32.mrb[0].mxu0
  %v2446 = vpop.f32.mrb[0].mxu0
  %v2447 = vadd.f32 %v2311, %v2446
  %v2448 = vpop.f32.mrb[0].mxu0
  %2449 = vmatprep.mubr.bf16.mxu0 0
  %2450 = vmatmul.mubr.bf16.gmra.mrb[0].mxu0 %v2289
  %v2451 = vpop.f32.mrb[0].mxu0
  %v2452 = vadd.f32 %v2311, %v2451
  %v2453 = vpop.f32.mrb[0].mxu0
  %v2454 = vpop.f32.mrb[0].mxu0
  %v2455 = vadd.f32 %v2311, %v2454
  %v2456 = vpop.f32.mrb[0].mxu0
  %2457 = vdwg.mxu0
  %2458 = vst [vmem:[%s9] sm:$0xff] %v2396
  %2459 = vst [vmem:[%s9 + $0x8] sm:$0xff] %v2399
  %2460 = vst [vmem:[%s9 + $0x10] sm:$0xff] %v2404
  %2461 = vst [vmem:[%s9 + $0x18] sm:$0xff] %v2407
  %2462 = vst [vmem:[%s9 + $0x20] sm:$0xff] %v2412
  %2463 = vst [vmem:[%s9 + $0x28] sm:$0xff] %v2415
  %2464 = vst [vmem:[%s9 + $0x30] sm:$0xff] %v2420
  %2465 = vst [vmem:[%s9 + $0x38] sm:$0xff] %v2423
  %2466 = vst [vmem:[%s9 + $0x40] sm:$0xff] %v2428
  %2467 = vst [vmem:[%s9 + $0x48] sm:$0xff] %v2431
  %2468 = vst [vmem:[%s9 + $0x50] sm:$0xff] %v2436
  %2469 = vst [vmem:[%s9 + $0x58] sm:$0xff] %v2439
  %2470 = vst [vmem:[%s9 + $0x60] sm:$0xff] %v2444
  %2471 = vst [vmem:[%s9 + $0x68] sm:$0xff] %v2447
  %2472 = vst [vmem:[%s9 + $0x70] sm:$0xff] %v2452
  %2473 = vst [vmem:[%s9 + $0x78] sm:$0xff] %v2455
  // Predicated region
  $region38: #{net_forward.1} parent=0 // pred_check
    _
  $region39: #{net_forward.1} parent=0 // pred_check_branch
    %2475 = sbr.rel (0) target = $region41
  $region40: #{net_forward.1} parent=0 // pred_region
    _
  $region41: #{net_forward.1} parent=0 // pred_fallthru
    _
  // Predicated region
  $region42: #{net_forward.1} parent=0 // pred_check
    _
  $region43: #{net_forward.1} parent=0 // pred_check_branch
    %2477 = sbr.rel (0) target = $region45
  $region44: #{net_forward.1} parent=0 // pred_region
    _
  $region45: #{net_forward.1} parent=0 // pred_fallthru
    _

</llo_original>
